<compile_context>
chip_gen: v7x
topology: tpu7x:2x2x1
jax: 0.10.0
libtpu: 0.0.40
codegen_flags: <defaults>
</compile_context>

<pallas_src>
import math

import jax
import jax.numpy as jnp
from jax.experimental import pallas as pl
from jax.experimental.pallas import tpu as pltpu

LANE = 128                       # TPU lane width; all feature dims padded to this.
FUSE_VMEM_BUDGET = 20 * 1024 * 1024   # fuse only if the whole problem fits comfortably.


# ------------------------- Pallas kernels -------------------------

def fused_gnn_kernel(a_ref, x_ref, p_ref,
                     w1_ref, b1_ref, w2_ref, b2_ref, wl_ref, bl_ref,
                     o_ref):
    """Whole forward pass in one VMEM-resident kernel (no grid).

    out = (P @ relu(A @ relu(A @ (X@W1) + b1) @ W2 + b2)) @ Wl + bl
    bf16 MXU inputs, f32 accumulation throughout.
    """
    # Layer 1: relu(A @ (X @ W1) + b1)
    xw1 = jnp.dot(x_ref[...], w1_ref[...], preferred_element_type=jnp.float32)
    h1 = jnp.maximum(
        jnp.dot(a_ref[...], xw1.astype(jnp.bfloat16),
                preferred_element_type=jnp.float32) + b1_ref[...],
        0.0).astype(jnp.bfloat16)

    # Layer 2: relu(A @ (H1 @ W2) + b2)
    hw2 = jnp.dot(h1, w2_ref[...], preferred_element_type=jnp.float32)
    h2 = jnp.maximum(
        jnp.dot(a_ref[...], hw2.astype(jnp.bfloat16),
                preferred_element_type=jnp.float32) + b2_ref[...],
        0.0).astype(jnp.bfloat16)

    # global_mean_pool (P is the precomputed mean-pool operator) + Linear head.
    pooled = jnp.dot(p_ref[...], h2, preferred_element_type=jnp.float32)
    o_ref[...] = (jnp.dot(pooled.astype(jnp.bfloat16), wl_ref[...],
                          preferred_element_type=jnp.float32) + bl_ref[...])


def gcn_layer_tiled_kernel(a_ref, x_ref, w_ref, b_ref, o_ref, acc_ref):
    """Tiled GCN layer (large-N fallback): O[i] = relu((sum_k A[i,k] @ X[k]) @ W + b).

    grid = (row tiles i, reduction tiles k); acc_ref is an f32 VMEM accumulator resident
    across k.  The @W matmul, bias and ReLU are hoisted into the k-finalize block.
    """
    k = pl.program_id(1)

    @pl.when(k == 0)
    def _():
        acc_ref[...] = jnp.zeros_like(acc_ref)

    acc_ref[...] += jnp.dot(a_ref[...], x_ref[...],
                            preferred_element_type=jnp.float32)

    @pl.when(k == pl.num_programs(1) - 1)
    def _():
        ax = acc_ref[...].astype(jnp.bfloat16)
        o_ref[...] = jnp.maximum(
            jnp.dot(ax, w_ref[...], preferred_element_type=jnp.float32) + b_ref[...],
            0.0).astype(o_ref.dtype)


def pool_head_tiled_kernel(p_ref, h_ref, wl_ref, bl_ref, o_ref, acc_ref):
    """global_mean_pool (tiled segment reduction via P tiles) + Linear head."""
    k = pl.program_id(0)

    @pl.when(k == 0)
    def _():
        acc_ref[...] = jnp.zeros_like(acc_ref)

    acc_ref[...] += jnp.dot(p_ref[...], h_ref[...],
                            preferred_element_type=jnp.float32)

    @pl.when(k == pl.num_programs(0) - 1)
    def _():
        pooled = acc_ref[...].astype(jnp.bfloat16)
        o_ref[...] = jnp.dot(pooled, wl_ref[...],
                             preferred_element_type=jnp.float32) + bl_ref[...]


# ------------------------- pallas_call wrappers -------------------------

def _fused_forward(a_p, x_p, p_p, w1_p, b1_p, w2_p, b2_p, wl_p, bl_p):
    g_pad = p_p.shape[0]
    vmem_spec = pl.BlockSpec(memory_space=pltpu.MemorySpace.VMEM)
    return pl.pallas_call(
        fused_gnn_kernel,
        out_shape=jax.ShapeDtypeStruct((g_pad, LANE), jnp.float32),
        in_specs=[vmem_spec] * 9,
        out_specs=vmem_spec,
        compiler_params=pltpu.CompilerParams(
            vmem_limit_bytes=32 * 1024 * 1024),
    )(a_p, x_p, p_p, w1_p, b1_p, w2_p, b2_p, wl_p, bl_p)


def _gcn_layer_tiled(a_p, x_p, w_p, b_p, tile_m, tile_k):
    n_pad = a_p.shape[0]
    grid = (n_pad // tile_m, n_pad // tile_k)
    return pl.pallas_call(
        gcn_layer_tiled_kernel,
        out_shape=jax.ShapeDtypeStruct((n_pad, LANE), jnp.bfloat16),
        grid_spec=pltpu.PrefetchScalarGridSpec(
            num_scalar_prefetch=0,
            grid=grid,
            in_specs=[
                pl.BlockSpec((tile_m, tile_k), lambda i, k: (i, k)),  # A_hat tile
                pl.BlockSpec((tile_k, LANE), lambda i, k: (k, 0)),    # X rows (A columns)
                pl.BlockSpec((LANE, LANE), lambda i, k: (0, 0)),      # W (resident)
                pl.BlockSpec((1, LANE), lambda i, k: (0, 0)),         # bias (resident)
            ],
            out_specs=pl.BlockSpec((tile_m, LANE), lambda i, k: (i, 0)),
            scratch_shapes=[pltpu.VMEM((tile_m, LANE), jnp.float32)],
        ),
        compiler_params=pltpu.CompilerParams(
            dimension_semantics=("parallel", "arbitrary"),
            vmem_limit_bytes=32 * 1024 * 1024,
        ),
    )(a_p, x_p, w_p, b_p)


def _pool_head_tiled(p_p, h_p, wl_p, bl_p, tile_k):
    g_pad, n_pad = p_p.shape
    grid = (n_pad // tile_k,)
    return pl.pallas_call(
        pool_head_tiled_kernel,
        out_shape=jax.ShapeDtypeStruct((g_pad, LANE), jnp.float32),
        grid_spec=pltpu.PrefetchScalarGridSpec(
            num_scalar_prefetch=0,
            grid=grid,
            in_specs=[
                pl.BlockSpec((g_pad, tile_k), lambda k: (0, k)),  # pool matrix tile
                pl.BlockSpec((tile_k, LANE), lambda k: (k, 0)),   # H2 rows
                pl.BlockSpec((LANE, LANE), lambda k: (0, 0)),     # W_lin (resident)
                pl.BlockSpec((1, LANE), lambda k: (0, 0)),        # b_lin (resident)
            ],
            out_specs=pl.BlockSpec((g_pad, LANE), lambda k: (0, 0)),
            scratch_shapes=[pltpu.VMEM((g_pad, LANE), jnp.float32)],
        ),
        compiler_params=pltpu.CompilerParams(
            dimension_semantics=("arbitrary",),
            vmem_limit_bytes=32 * 1024 * 1024,
        ),
    )(p_p, h_p, wl_p, bl_p)


# ------------------------- plain-JAX glue -------------------------

def _round_up(n, m):
    return (n + m - 1) // m * m


def _pad_to(x, shape):
    pads = [(0, s - d) for d, s in zip(x.shape, shape)]
    return jnp.pad(x, pads)


def _fused_vmem_bytes(n_pad, g_pad):
    """Rough VMEM footprint of the fused kernel (inputs + f32 intermediates)."""
    a = 2 * n_pad * n_pad                      # A_hat bf16
    x = 2 * n_pad * LANE                       # X bf16
    p = 2 * g_pad * n_pad                      # pool matrix bf16
    w = 3 * 2 * LANE * LANE + 3 * 4 * LANE     # weights + biases
    inter = 3 * 4 * n_pad * LANE               # xw/h1/h2-ish f32 intermediates
    out = 4 * g_pad * LANE
    return a + x + p + w + inter + out


def build_gcn_adjacency(edge_index, num_nodes):
    """Dense D^{-1/2} (A + I) D^{-1/2}, matching torch_geometric GCNConv defaults."""
    src, dst = edge_index[0], edge_index[1]
    a = jnp.zeros((num_nodes, num_nodes), jnp.float32)
    a = a.at[dst, src].add(1.0)                            # messages src -> dst
    a = a + jnp.eye(num_nodes, dtype=jnp.float32)          # self loops
    deg = jnp.sum(a, axis=1)
    dinv = jnp.where(deg > 0, 1.0 / jnp.sqrt(deg), 0.0)
    return dinv[:, None] * a * dinv[None, :]


def build_pool_matrix(batch, num_graphs):
    """Mean-pool operator P: [G, N], P[g, n] = 1/count_g if batch[n] == g."""
    onehot = (batch[None, :] == jnp.arange(num_graphs)[:, None]).astype(jnp.float32)
    counts = jnp.maximum(jnp.sum(onehot, axis=1, keepdims=True), 1.0)
    return onehot / counts


def init_params(key, num_node_features, num_classes):
    k1, k2, k3 = jax.random.split(key, 3)
    w1 = jax.random.normal(k1, (num_node_features, 16), jnp.float32) * 0.1
    b1 = jnp.zeros((16,), jnp.float32)
    w2 = jax.random.normal(k2, (16, 8), jnp.float32) * 0.1
    b2 = jnp.zeros((8,), jnp.float32)
    wl = jax.random.normal(k3, (8, num_classes), jnp.float32) * 0.1
    bl = jnp.zeros((num_classes,), jnp.float32)
    return (w1, b1, w2, b2, wl, bl)


def player_performance_gnn(x, edge_index, batch, num_graphs, params,
                           *, tile_m=512, tile_k=512, force_tiled=False):
    """Forward pass. x: [N, F_in] -> logits [num_graphs, num_classes] (f32)."""
    w1, b1, w2, b2, wl, bl = params
    n = x.shape[0]
    num_classes = wl.shape[1]

    g_pad = _round_up(max(num_graphs, 1), 8)
    n_pad_fused = _round_up(max(n, 1), LANE)
    use_fused = (not force_tiled) and (
        _fused_vmem_bytes(n_pad_fused, g_pad) <= FUSE_VMEM_BUDGET)

    # Pad to lcm(tile_m, tile_k) on the tiled path so both tilings divide evenly.
    n_pad = n_pad_fused if use_fused else _round_up(max(n, 1), math.lcm(tile_m, tile_k))

    a_hat = build_gcn_adjacency(edge_index, n)
    pool = build_pool_matrix(batch, num_graphs)

    # Zero-pad to lane-dense / tile-aligned shapes; cast MXU operands to bf16.
    a_p = _pad_to(a_hat, (n_pad, n_pad)).astype(jnp.bfloat16)
    x_p = _pad_to(x, (n_pad, LANE)).astype(jnp.bfloat16)
    p_p = _pad_to(pool, (g_pad, n_pad)).astype(jnp.bfloat16)

    w1_p = _pad_to(w1, (LANE, LANE)).astype(jnp.bfloat16)
    b1_p = _pad_to(b1.reshape(1, -1), (1, LANE)).astype(jnp.float32)
    w2_p = _pad_to(w2, (LANE, LANE)).astype(jnp.bfloat16)
    b2_p = _pad_to(b2.reshape(1, -1), (1, LANE)).astype(jnp.float32)
    wl_p = _pad_to(wl, (LANE, LANE)).astype(jnp.bfloat16)
    bl_p = _pad_to(bl.reshape(1, -1), (1, LANE)).astype(jnp.float32)

    if use_fused:
        out_p = _fused_forward(a_p, x_p, p_p, w1_p, b1_p, w2_p, b2_p, wl_p, bl_p)
    else:
        h1 = _gcn_layer_tiled(a_p, x_p, w1_p, b1_p, tile_m, tile_k)   # [n_pad, 128] bf16
        h2 = _gcn_layer_tiled(a_p, h1, w2_p, b2_p, tile_m, tile_k)    # [n_pad, 128] bf16
        out_p = _pool_head_tiled(p_p, h2, wl_p, bl_p, tile_k)         # [g_pad, 128] f32

    return out_p[:num_graphs, :num_classes]


def reference_forward(x, a_hat, pool_mat, params):
    w1, b1, w2, b2, wl, bl = params
    h1 = jnp.maximum(a_hat @ (x @ w1) + b1, 0.0)
    h2 = jnp.maximum(a_hat @ (h1 @ w2) + b2, 0.0)
    pooled = pool_mat @ h2
    return pooled @ wl + bl


# ------------------------- main -------------------------

if __name__ == "__main__":
    key = jax.random.PRNGKey(0)
    num_node_features = 8
    num_classes = 3
    num_graphs = 8
    nodes_per_graph = 40
    num_nodes = num_graphs * nodes_per_graph      # 320 -> padded to 384

    kx, kp = jax.random.split(key)
    x = jax.random.normal(kx, (num_nodes, num_node_features), jnp.float32)

    # Deterministic edge_index: a bidirectional ring inside each graph.
    edges = []
    for g in range(num_graphs):
        base = g * nodes_per_graph
        for i in range(nodes_per_graph):
            s, d = base + i, base + (i + 1) % nodes_per_graph
            edges.append((s, d))
            edges.append((d, s))
    edge_index = jnp.array(edges, dtype=jnp.int32).T                      # [2, E]
    batch = jnp.repeat(jnp.arange(num_graphs, dtype=jnp.int32),
                       nodes_per_graph)                                   # [N]

    params = init_params(kp, num_node_features, num_classes)

    # Primary fused single-call path (selected automatically at this size).
    out = player_performance_gnn(x, edge_index, batch, num_graphs, params)
    out = jax.block_until_ready(out)

    # Exercise the tiled large-N fallback too (small tiles to hit the k-reduction path).
    out_tiled = player_performance_gnn(x, edge_index, batch, num_graphs, params,
                                       force_tiled=True, tile_m=128, tile_k=128)
    out_tiled = jax.block_until_ready(out_tiled)

    a_hat = build_gcn_adjacency(edge_index, num_nodes)
    pool_mat = build_pool_matrix(batch, num_graphs)
    ref = reference_forward(x, a_hat, pool_mat, params)

    assert out.shape == (num_graphs, num_classes)
    # bf16 MXU inputs + f32 accumulation -> compare against f32 reference with bf16-level tol.
    assert jnp.allclose(out, ref, atol=1e-2, rtol=5e-2), (out, ref)
    assert jnp.allclose(out_tiled, ref, atol=1e-2, rtol=5e-2), (out_tiled, ref)

    print("KERNEL_OK")
</pallas_src>

<mosaic_0001>
module attributes {stable_mosaic.version = 11 : i64} {
  func.func @fused_gnn_kernel(%arg0: memref<384x384xbf16, #tpu.memory_space<vmem>>, %arg1: memref<384x128xbf16, #tpu.memory_space<vmem>>, %arg2: memref<8x384xbf16, #tpu.memory_space<vmem>>, %arg3: memref<128x128xbf16, #tpu.memory_space<vmem>>, %arg4: memref<1x128xf32, #tpu.memory_space<vmem>>, %arg5: memref<128x128xbf16, #tpu.memory_space<vmem>>, %arg6: memref<1x128xf32, #tpu.memory_space<vmem>>, %arg7: memref<128x128xbf16, #tpu.memory_space<vmem>>, %arg8: memref<1x128xf32, #tpu.memory_space<vmem>>, %arg9: memref<8x128xf32, #tpu.memory_space<vmem>>) attributes {dimension_semantics = [], scalar_prefetch = 0 : i64, scratch_operands = 0 : i64, tpu.core_type = #tpu.core_type<tc>} {
    %c0 = arith.constant 0 : index
    %c0_0 = arith.constant 0 : index
    %0 = vector.load %arg1[%c0, %c0_0] : memref<384x128xbf16, #tpu.memory_space<vmem>>, vector<384x128xbf16>
    %c0_1 = arith.constant 0 : index
    %c0_2 = arith.constant 0 : index
    %1 = vector.load %arg3[%c0_1, %c0_2] : memref<128x128xbf16, #tpu.memory_space<vmem>>, vector<128x128xbf16>
    %cst = arith.constant dense<0.000000e+00> : vector<384x128xf32>
    %2 = tpu.matmul %0, %1, %cst {dimension_numbers = #tpu.dot_dimension_numbers<[1], [0], [0], [1], [0, 0, 1, 1], [], []>} : vector<384x128xbf16>, vector<128x128xbf16>, vector<384x128xf32> -> vector<384x128xf32>
    %c0_3 = arith.constant 0 : index
    %c0_4 = arith.constant 0 : index
    %3 = vector.load %arg0[%c0_3, %c0_4] : memref<384x384xbf16, #tpu.memory_space<vmem>>, vector<384x384xbf16>
    %4 = arith.truncf %2 : vector<384x128xf32> to vector<384x128xbf16>
    %cst_5 = arith.constant dense<0.000000e+00> : vector<384x128xf32>
    %5 = tpu.matmul %3, %4, %cst_5 {dimension_numbers = #tpu.dot_dimension_numbers<[1], [0], [0], [1], [0, 0, 1, 1], [], []>} : vector<384x384xbf16>, vector<384x128xbf16>, vector<384x128xf32> -> vector<384x128xf32>
    %c0_6 = arith.constant 0 : index
    %c0_7 = arith.constant 0 : index
    %6 = vector.load %arg4[%c0_6, %c0_7] : memref<1x128xf32, #tpu.memory_space<vmem>>, vector<1x128xf32>
    %7 = vector.broadcast %6 : vector<1x128xf32> to vector<384x128xf32>
    %8 = arith.addf %5, %7 : vector<384x128xf32>
    %cst_8 = arith.constant 0.000000e+00 : f32
    %9 = vector.broadcast %cst_8 : f32 to vector<384x128xf32>
    %10 = arith.maximumf %8, %9 : vector<384x128xf32>
    %11 = arith.truncf %10 : vector<384x128xf32> to vector<384x128xbf16>
    %c0_9 = arith.constant 0 : index
    %c0_10 = arith.constant 0 : index
    %12 = vector.load %arg5[%c0_9, %c0_10] : memref<128x128xbf16, #tpu.memory_space<vmem>>, vector<128x128xbf16>
    %cst_11 = arith.constant dense<0.000000e+00> : vector<384x128xf32>
    %13 = tpu.matmul %11, %12, %cst_11 {dimension_numbers = #tpu.dot_dimension_numbers<[1], [0], [0], [1], [0, 0, 1, 1], [], []>} : vector<384x128xbf16>, vector<128x128xbf16>, vector<384x128xf32> -> vector<384x128xf32>
    %c0_12 = arith.constant 0 : index
    %c0_13 = arith.constant 0 : index
    %14 = vector.load %arg0[%c0_12, %c0_13] : memref<384x384xbf16, #tpu.memory_space<vmem>>, vector<384x384xbf16>
    %15 = arith.truncf %13 : vector<384x128xf32> to vector<384x128xbf16>
    %cst_14 = arith.constant dense<0.000000e+00> : vector<384x128xf32>
    %16 = tpu.matmul %14, %15, %cst_14 {dimension_numbers = #tpu.dot_dimension_numbers<[1], [0], [0], [1], [0, 0, 1, 1], [], []>} : vector<384x384xbf16>, vector<384x128xbf16>, vector<384x128xf32> -> vector<384x128xf32>
    %c0_15 = arith.constant 0 : index
    %c0_16 = arith.constant 0 : index
    %17 = vector.load %arg6[%c0_15, %c0_16] : memref<1x128xf32, #tpu.memory_space<vmem>>, vector<1x128xf32>
    %18 = vector.broadcast %17 : vector<1x128xf32> to vector<384x128xf32>
    %19 = arith.addf %16, %18 : vector<384x128xf32>
    %cst_17 = arith.constant 0.000000e+00 : f32
    %20 = vector.broadcast %cst_17 : f32 to vector<384x128xf32>
    %21 = arith.maximumf %19, %20 : vector<384x128xf32>
    %22 = arith.truncf %21 : vector<384x128xf32> to vector<384x128xbf16>
    %c0_18 = arith.constant 0 : index
    %c0_19 = arith.constant 0 : index
    %23 = vector.load %arg2[%c0_18, %c0_19] : memref<8x384xbf16, #tpu.memory_space<vmem>>, vector<8x384xbf16>
    %cst_20 = arith.constant dense<0.000000e+00> : vector<8x128xf32>
    %24 = tpu.matmul %23, %22, %cst_20 {dimension_numbers = #tpu.dot_dimension_numbers<[1], [0], [0], [1], [0, 0, 1, 1], [], []>} : vector<8x384xbf16>, vector<384x128xbf16>, vector<8x128xf32> -> vector<8x128xf32>
    %25 = arith.truncf %24 : vector<8x128xf32> to vector<8x128xbf16>
    %c0_21 = arith.constant 0 : index
    %c0_22 = arith.constant 0 : index
    %26 = vector.load %arg7[%c0_21, %c0_22] : memref<128x128xbf16, #tpu.memory_space<vmem>>, vector<128x128xbf16>
    %cst_23 = arith.constant dense<0.000000e+00> : vector<8x128xf32>
    %27 = tpu.matmul %25, %26, %cst_23 {dimension_numbers = #tpu.dot_dimension_numbers<[1], [0], [0], [1], [0, 0, 1, 1], [], []>} : vector<8x128xbf16>, vector<128x128xbf16>, vector<8x128xf32> -> vector<8x128xf32>
    %c0_24 = arith.constant 0 : index
    %c0_25 = arith.constant 0 : index
    %28 = vector.load %arg8[%c0_24, %c0_25] : memref<1x128xf32, #tpu.memory_space<vmem>>, vector<1x128xf32>
    %29 = vector.broadcast %28 : vector<1x128xf32> to vector<8x128xf32>
    %30 = arith.addf %27, %29 : vector<8x128xf32>
    %c0_26 = arith.constant 0 : index
    %c0_27 = arith.constant 0 : index
    %31 = vector.load %arg9[%c0_26, %c0_27] : memref<8x128xf32, #tpu.memory_space<vmem>>, vector<8x128xf32>
    tpu.vector_store %arg9[%c0_26, %c0_27], %30 {strides = array<i32>} : memref<8x128xf32, #tpu.memory_space<vmem>>, vector<8x128xf32>,
    return
  }
}

</mosaic_0001>

<llo_original>
// kernel: tpu_custom_call.1
$region0: #{tpu_custom_call.1}
  #allocation0 [shape = 'u32[]', space=smem, size = 0x4, offset = 0x4, fixed_abs, tag = 'smem constant byte address 0x4 - core index']
  #allocation1 [shape = 'u32[144,128]{1,0:T(1,128)}', space=vmem, size = 0x12000, scoped, tag = 'internal scratch']
  %s0 = inlined_call_operand.hbm [shape: bf16[384,384], index: 0, kind: input, shape index: {}]
  %s1 = inlined_call_operand.hbm [shape: bf16[384,128], index: 1, kind: input, shape index: {}]
  %s2 = inlined_call_operand.hbm [shape: bf16[8,384], index: 2, kind: input, shape index: {}]
  %s3 = inlined_call_operand.hbm [shape: bf16[128,128], index: 3, kind: input, shape index: {}]
  %s4 = inlined_call_operand.vmem [shape: f32[1,128], index: 4, kind: input, shape index: {}]
  %s5 = inlined_call_operand.hbm [shape: bf16[128,128], index: 5, kind: input, shape index: {}]
  %s6 = inlined_call_operand.vmem [shape: f32[1,128], index: 6, kind: input, shape index: {}]
  %s7 = inlined_call_operand.hbm [shape: bf16[128,128], index: 7, kind: input, shape index: {}]
  %s8 = inlined_call_operand.vmem [shape: f32[1,128], index: 8, kind: input, shape index: {}]
  %s9 = inlined_call_operand.hbm [shape: f32[8,128], index: 9, kind: output, shape index: {}]
  %s10 = sld [smem:[#allocation0]]
  $region70: #{tpu_custom_call.1} parent=0
    _
  %s12 = ssub.s32 1, %s10
  %s13 = scalar_select 0, %s12, %s10
  $region1: #{tpu_custom_call.1} parent=0
    #allocation2 [shape = 'u8[294912]{0}', space=vmem, size = 0x48000, scoped, tag = 'input window, operand 0, single buffered']
    #allocation3 [shape = 's32[1]{0}', space=sflag, size = 0x4, scoped, tag = 'scoped memory for tpu_custom_call.1']
    #allocation4 [shape = 's32[1]{0}', space=sflag, size = 0x4, scoped, tag = 'scoped memory for tpu_custom_call.1']
    #allocation5 [shape = 'u8[98304]{0}', space=vmem, size = 0x18000, scoped, tag = 'input window, operand 1, single buffered']
    #allocation6 [shape = 's32[1]{0}', space=sflag, size = 0x4, scoped, tag = 'scoped memory for tpu_custom_call.1']
    #allocation7 [shape = 'u8[6144]{0}', space=vmem, size = 0x1800, scoped, tag = 'input window, operand 2, single buffered']
    #allocation8 [shape = 'u8[32768]{0}', space=vmem, size = 0x8000, scoped, tag = 'input window, operand 3, single buffered']
    #allocation9 [shape = 's32[1]{0}', space=sflag, size = 0x4, scoped, tag = 'scoped memory for tpu_custom_call.1']
    #allocation10 [shape = 'u8[32768]{0}', space=vmem, size = 0x8000, scoped, tag = 'input window, operand 5, single buffered']
    #allocation11 [shape = 'u8[32768]{0}', space=vmem, size = 0x8000, scoped, tag = 'input window, operand 7, single buffered']
    #allocation12 [shape = 's32[1]{0}', space=sflag, size = 0x4, scoped, tag = 'scoped memory for tpu_custom_call.1']
    #allocation13 [shape = 'u8[4096]{0}', space=vmem, size = 0x1000, scoped, tag = 'output window, operand 0, single buffered']
    %14 = vsyncpa [#allocation3], 0
    %15 = vsyncpa [#allocation6], 0
    %16 = vsyncpa [#allocation9], 0
    %17 = vsyncpa [#allocation12], 0
    %18 = vsyncpa [#allocation4], 0
    // Predicated region
    $region2: #{tpu_custom_call.1} parent=1 // pred_check
      _
    $region3: #{tpu_custom_call.1} parent=1 // pred_check_branch
      %20 = sbr.rel (0) target = $region5
    $region4: #{tpu_custom_call.1} parent=1 // pred_region
      %s22 = ssub.s32 9216, 9216
      %23 = vsyncadd [#allocation3], %s22
      %s24 = sshll.u32 [#allocation2], 4
      %s25 = int_to_ptr.vmem [resolvable:$true] %s24
      %30 = dma.hbm_to_vmem [thread:$0]  %s0, 9216, %s25, [#allocation3], 192, 192, 12
    $region5: #{tpu_custom_call.1} parent=1 // pred_fallthru
      _
    // Predicated region
    $region6: #{tpu_custom_call.1} parent=1 // pred_check
      _
    $region7: #{tpu_custom_call.1} parent=1 // pred_check_branch
      %32 = sbr.rel (0) target = $region9
    $region8: #{tpu_custom_call.1} parent=1 // pred_region
      %s34 = ssub.s32 3072, 3072
      %35 = vsyncadd [#allocation6], %s34
      %s36 = sshll.u32 [#allocation5], 4
      %s37 = int_to_ptr.vmem [resolvable:$true] %s36
      %42 = dma.hbm_to_vmem [thread:$0]  %s1, 3072, %s37, [#allocation6], 64, 64, 4
    $region9: #{tpu_custom_call.1} parent=1 // pred_fallthru
      _
    // Predicated region
    $region10: #{tpu_custom_call.1} parent=1 // pred_check
      _
    $region11: #{tpu_custom_call.1} parent=1 // pred_check_branch
      %44 = sbr.rel (0) target = $region13
    $region12: #{tpu_custom_call.1} parent=1 // pred_region
      %s46 = ssub.s32 192, 192
      %47 = vsyncadd [#allocation6], %s46
      %s49 = sshll.u32 [#allocation7], 4
      %s50 = int_to_ptr.vmem [resolvable:$true] %s49
      %52 = dma.hbm_to_vmem [thread:$0]  %s2, 192, %s50, [#allocation6]
    $region13: #{tpu_custom_call.1} parent=1 // pred_fallthru
      _
    // Predicated region
    $region14: #{tpu_custom_call.1} parent=1 // pred_check
      _
    $region15: #{tpu_custom_call.1} parent=1 // pred_check_branch
      %54 = sbr.rel (0) target = $region17
    $region16: #{tpu_custom_call.1} parent=1 // pred_region
      %s56 = ssub.s32 1024, 1024
      %57 = vsyncadd [#allocation9], %s56
      %s58 = sshll.u32 [#allocation8], 4
      %s59 = int_to_ptr.vmem [resolvable:$true] %s58
      %64 = dma.hbm_to_vmem [thread:$0]  %s3, 1024, %s59, [#allocation9], 64, 64, 4
    $region17: #{tpu_custom_call.1} parent=1 // pred_fallthru
      _
    // Predicated region
    $region18: #{tpu_custom_call.1} parent=1 // pred_check
      _
    $region19: #{tpu_custom_call.1} parent=1 // pred_check_branch
      %66 = sbr.rel (0) target = $region21
    $region20: #{tpu_custom_call.1} parent=1 // pred_region
      _
    $region21: #{tpu_custom_call.1} parent=1 // pred_fallthru
      _
    // Predicated region
    $region22: #{tpu_custom_call.1} parent=1 // pred_check
      _
    $region23: #{tpu_custom_call.1} parent=1 // pred_check_branch
      %68 = sbr.rel (0) target = $region25
    $region24: #{tpu_custom_call.1} parent=1 // pred_region
      %s70 = ssub.s32 1024, 1024
      %71 = vsyncadd [#allocation9], %s70
      %s72 = sshll.u32 [#allocation10], 4
      %s73 = int_to_ptr.vmem [resolvable:$true] %s72
      %78 = dma.hbm_to_vmem [thread:$0]  %s5, 1024, %s73, [#allocation9], 64, 64, 4
    $region25: #{tpu_custom_call.1} parent=1 // pred_fallthru
      _
    // Predicated region
    $region26: #{tpu_custom_call.1} parent=1 // pred_check
      _
    $region27: #{tpu_custom_call.1} parent=1 // pred_check_branch
      %80 = sbr.rel (0) target = $region29
    $region28: #{tpu_custom_call.1} parent=1 // pred_region
      _
    $region29: #{tpu_custom_call.1} parent=1 // pred_fallthru
      _
    // Predicated region
    $region30: #{tpu_custom_call.1} parent=1 // pred_check
      _
    $region31: #{tpu_custom_call.1} parent=1 // pred_check_branch
      %82 = sbr.rel (0) target = $region33
    $region32: #{tpu_custom_call.1} parent=1 // pred_region
      %s84 = ssub.s32 1024, 1024
      %85 = vsyncadd [#allocation12], %s84
      %s86 = sshll.u32 [#allocation11], 4
      %s87 = int_to_ptr.vmem [resolvable:$true] %s86
      %92 = dma.hbm_to_vmem [thread:$0]  %s7, 1024, %s87, [#allocation12], 64, 64, 4
    $region33: #{tpu_custom_call.1} parent=1 // pred_fallthru
      _
    // Predicated region
    $region34: #{tpu_custom_call.1} parent=1 // pred_check
      _
    $region35: #{tpu_custom_call.1} parent=1 // pred_check_branch
      %94 = sbr.rel (0) target = $region37
    $region36: #{tpu_custom_call.1} parent=1 // pred_region
      _
    $region37: #{tpu_custom_call.1} parent=1 // pred_fallthru
      _
    // Predicated region
    $region38: #{tpu_custom_call.1} parent=1 // pred_check
      _
    $region39: #{tpu_custom_call.1} parent=1 // pred_check_branch
      %96 = sbr.rel (0) target = $region41
    $region40: #{tpu_custom_call.1} parent=1 // pred_region
      %97 = dma.done [#allocation3], 9216
    $region41: #{tpu_custom_call.1} parent=1 // pred_fallthru
      _
    // Predicated region
    $region42: #{tpu_custom_call.1} parent=1 // pred_check
      _
    $region43: #{tpu_custom_call.1} parent=1 // pred_check_branch
      %99 = sbr.rel (0) target = $region45
    $region44: #{tpu_custom_call.1} parent=1 // pred_region
      %100 = dma.done [#allocation6], 3072
    $region45: #{tpu_custom_call.1} parent=1 // pred_fallthru
      _
    // Predicated region
    $region46: #{tpu_custom_call.1} parent=1 // pred_check
      _
    $region47: #{tpu_custom_call.1} parent=1 // pred_check_branch
      %102 = sbr.rel (0) target = $region49
    $region48: #{tpu_custom_call.1} parent=1 // pred_region
      %103 = dma.done [#allocation6], 192
    $region49: #{tpu_custom_call.1} parent=1 // pred_fallthru
      _
    // Predicated region
    $region50: #{tpu_custom_call.1} parent=1 // pred_check
      _
    $region51: #{tpu_custom_call.1} parent=1 // pred_check_branch
      %105 = sbr.rel (0) target = $region53
    $region52: #{tpu_custom_call.1} parent=1 // pred_region
      %106 = dma.done [#allocation9], 1024
    $region53: #{tpu_custom_call.1} parent=1 // pred_fallthru
      _
    // Predicated region
    $region54: #{tpu_custom_call.1} parent=1 // pred_check
      _
    $region55: #{tpu_custom_call.1} parent=1 // pred_check_branch
      %108 = sbr.rel (0) target = $region57
    $region56: #{tpu_custom_call.1} parent=1 // pred_region
      %109 = dma.done [#allocation9], 1024
    $region57: #{tpu_custom_call.1} parent=1 // pred_fallthru
      _
    // Predicated region
    $region58: #{tpu_custom_call.1} parent=1 // pred_check
      _
    $region59: #{tpu_custom_call.1} parent=1 // pred_check_branch
      %111 = sbr.rel (0) target = $region61
    $region60: #{tpu_custom_call.1} parent=1 // pred_region
      %112 = dma.done [#allocation12], 1024
    $region61: #{tpu_custom_call.1} parent=1 // pred_fallthru
      _
    %v114 = vld [vmem:[#allocation5] sm:$0xf]
    %v115 = vld [vmem:[#allocation5 + $0x4] sm:$0xf]
    %v116 = vld [vmem:[#allocation5 + $0x8] sm:$0xf]
    %v117 = vld [vmem:[#allocation5 + $0xc] sm:$0xf]
    %v118 = vld [vmem:[#allocation5 + $0x10] sm:$0xf]
    %v119 = vld [vmem:[#allocation5 + $0x14] sm:$0xf]
    %v120 = vld [vmem:[#allocation5 + $0x18] sm:$0xf]
    %v121 = vld [vmem:[#allocation5 + $0x1c] sm:$0xf]
    %v122 = vld [vmem:[#allocation5 + $0x20] sm:$0xf]
    %v123 = vld [vmem:[#allocation5 + $0x24] sm:$0xf]
    %v124 = vld [vmem:[#allocation5 + $0x28] sm:$0xf]
    %v125 = vld [vmem:[#allocation5 + $0x2c] sm:$0xf]
    %v126 = vld [vmem:[#allocation5 + $0x30] sm:$0xf]
    %v127 = vld [vmem:[#allocation5 + $0x34] sm:$0xf]
    %v128 = vld [vmem:[#allocation5 + $0x38] sm:$0xf]
    %v129 = vld [vmem:[#allocation5 + $0x3c] sm:$0xf]
    %v130 = vld [vmem:[#allocation5 + $0x40] sm:$0xf]
    %v131 = vld [vmem:[#allocation5 + $0x44] sm:$0xf]
    %v132 = vld [vmem:[#allocation5 + $0x48] sm:$0xf]
    %v133 = vld [vmem:[#allocation5 + $0x4c] sm:$0xf]
    %v134 = vld [vmem:[#allocation5 + $0x50] sm:$0xf]
    %v135 = vld [vmem:[#allocation5 + $0x54] sm:$0xf]
    %v136 = vld [vmem:[#allocation5 + $0x58] sm:$0xf]
    %v137 = vld [vmem:[#allocation5 + $0x5c] sm:$0xf]
    %v138 = vld [vmem:[#allocation5 + $0x60] sm:$0xf]
    %v139 = vld [vmem:[#allocation5 + $0x64] sm:$0xf]
    %v140 = vld [vmem:[#allocation5 + $0x68] sm:$0xf]
    %v141 = vld [vmem:[#allocation5 + $0x6c] sm:$0xf]
    %v142 = vld [vmem:[#allocation5 + $0x70] sm:$0xf]
    %v143 = vld [vmem:[#allocation5 + $0x74] sm:$0xf]
    %v144 = vld [vmem:[#allocation5 + $0x78] sm:$0xf]
    %v145 = vld [vmem:[#allocation5 + $0x7c] sm:$0xf]
    %v146 = vld [vmem:[#allocation5 + $0x80] sm:$0xf]
    %v147 = vld [vmem:[#allocation5 + $0x84] sm:$0xf]
    %v148 = vld [vmem:[#allocation5 + $0x88] sm:$0xf]
    %v149 = vld [vmem:[#allocation5 + $0x8c] sm:$0xf]
    %v150 = vld [vmem:[#allocation5 + $0x90] sm:$0xf]
    %v151 = vld [vmem:[#allocation5 + $0x94] sm:$0xf]
    %v152 = vld [vmem:[#allocation5 + $0x98] sm:$0xf]
    %v153 = vld [vmem:[#allocation5 + $0x9c] sm:$0xf]
    %v154 = vld [vmem:[#allocation5 + $0xa0] sm:$0xf]
    %v155 = vld [vmem:[#allocation5 + $0xa4] sm:$0xf]
    %v156 = vld [vmem:[#allocation5 + $0xa8] sm:$0xf]
    %v157 = vld [vmem:[#allocation5 + $0xac] sm:$0xf]
    %v158 = vld [vmem:[#allocation5 + $0xb0] sm:$0xf]
    %v159 = vld [vmem:[#allocation5 + $0xb4] sm:$0xf]
    %v160 = vld [vmem:[#allocation5 + $0xb8] sm:$0xf]
    %v161 = vld [vmem:[#allocation5 + $0xbc] sm:$0xf]
    %v162 = vld [vmem:[#allocation8] sm:$0xf]
    %v163 = vld [vmem:[#allocation8 + $0x4] sm:$0xf]
    %v164 = vld [vmem:[#allocation8 + $0x8] sm:$0xf]
    %v165 = vld [vmem:[#allocation8 + $0xc] sm:$0xf]
    %v166 = vld [vmem:[#allocation8 + $0x10] sm:$0xf]
    %v167 = vld [vmem:[#allocation8 + $0x14] sm:$0xf]
    %v168 = vld [vmem:[#allocation8 + $0x18] sm:$0xf]
    %v169 = vld [vmem:[#allocation8 + $0x1c] sm:$0xf]
    %v170 = vld [vmem:[#allocation8 + $0x20] sm:$0xf]
    %v171 = vld [vmem:[#allocation8 + $0x24] sm:$0xf]
    %v172 = vld [vmem:[#allocation8 + $0x28] sm:$0xf]
    %v173 = vld [vmem:[#allocation8 + $0x2c] sm:$0xf]
    %v174 = vld [vmem:[#allocation8 + $0x30] sm:$0xf]
    %v175 = vld [vmem:[#allocation8 + $0x34] sm:$0xf]
    %v176 = vld [vmem:[#allocation8 + $0x38] sm:$0xf]
    %v177 = vld [vmem:[#allocation8 + $0x3c] sm:$0xf]
    %v226 = vunpack.c.l.b16 %v114
    %v227 = vunpack.c.l.b16 %v115
    %v228 = vunpack.c.l.b16 %v116
    %v229 = vunpack.c.l.b16 %v117
    %v230 = vunpack.c.l.b16 %v118
    %v231 = vunpack.c.l.b16 %v119
    %v232 = vunpack.c.l.b16 %v120
    %v233 = vunpack.c.l.b16 %v121
    %v234 = vunpack.c.l.b16 %v122
    %v235 = vunpack.c.l.b16 %v123
    %v236 = vunpack.c.l.b16 %v124
    %v237 = vunpack.c.l.b16 %v125
    %v238 = vunpack.c.l.b16 %v126
    %v239 = vunpack.c.l.b16 %v127
    %v240 = vunpack.c.l.b16 %v128
    %v241 = vunpack.c.l.b16 %v129
    %v242 = vunpack.c.l.b16 %v130
    %v243 = vunpack.c.l.b16 %v131
    %v244 = vunpack.c.l.b16 %v132
    %v245 = vunpack.c.l.b16 %v133
    %v246 = vunpack.c.l.b16 %v134
    %v247 = vunpack.c.l.b16 %v135
    %v248 = vunpack.c.l.b16 %v136
    %v249 = vunpack.c.l.b16 %v137
    %v250 = vunpack.c.l.b16 %v138
    %v251 = vunpack.c.l.b16 %v139
    %v252 = vunpack.c.l.b16 %v140
    %v253 = vunpack.c.l.b16 %v141
    %v254 = vunpack.c.l.b16 %v142
    %v255 = vunpack.c.l.b16 %v143
    %v256 = vunpack.c.l.b16 %v144
    %v257 = vunpack.c.l.b16 %v145
    %v258 = vunpack.c.l.b16 %v146
    %v259 = vunpack.c.l.b16 %v147
    %v260 = vunpack.c.l.b16 %v148
    %v261 = vunpack.c.l.b16 %v149
    %v262 = vunpack.c.l.b16 %v150
    %v263 = vunpack.c.l.b16 %v151
    %v264 = vunpack.c.l.b16 %v152
    %v265 = vunpack.c.l.b16 %v153
    %v266 = vunpack.c.l.b16 %v154
    %v267 = vunpack.c.l.b16 %v155
    %v268 = vunpack.c.l.b16 %v156
    %v269 = vunpack.c.l.b16 %v157
    %v270 = vunpack.c.l.b16 %v158
    %v271 = vunpack.c.l.b16 %v159
    %v272 = vunpack.c.l.b16 %v160
    %v273 = vunpack.c.l.b16 %v161
    %v274 = vpack.c.b16 %v227, %v226
    %v275 = vpack.c.b16 %v229, %v228
    %v276 = vpack.c.b16 %v231, %v230
    %v277 = vpack.c.b16 %v233, %v232
    %v278 = vpack.c.b16 %v235, %v234
    %v279 = vpack.c.b16 %v237, %v236
    %v280 = vpack.c.b16 %v239, %v238
    %v281 = vpack.c.b16 %v241, %v240
    %v282 = vpack.c.b16 %v243, %v242
    %v283 = vpack.c.b16 %v245, %v244
    %v284 = vpack.c.b16 %v247, %v246
    %v285 = vpack.c.b16 %v249, %v248
    %v286 = vpack.c.b16 %v251, %v250
    %v287 = vpack.c.b16 %v253, %v252
    %v288 = vpack.c.b16 %v255, %v254
    %v289 = vpack.c.b16 %v257, %v256
    %v290 = vpack.c.b16 %v259, %v258
    %v291 = vpack.c.b16 %v261, %v260
    %v292 = vpack.c.b16 %v263, %v262
    %v293 = vpack.c.b16 %v265, %v264
    %v294 = vpack.c.b16 %v267, %v266
    %v295 = vpack.c.b16 %v269, %v268
    %v296 = vpack.c.b16 %v271, %v270
    %v297 = vpack.c.b16 %v273, %v272
    %v338 = vunpack.c.l.b16 %v162
    %v339 = vunpack.c.l.b16 %v163
    %v340 = vunpack.c.l.b16 %v164
    %v341 = vunpack.c.l.b16 %v165
    %v342 = vunpack.c.l.b16 %v166
    %v343 = vunpack.c.l.b16 %v167
    %v344 = vunpack.c.l.b16 %v168
    %v345 = vunpack.c.l.b16 %v169
    %v346 = vunpack.c.l.b16 %v170
    %v347 = vunpack.c.l.b16 %v171
    %v348 = vunpack.c.l.b16 %v172
    %v349 = vunpack.c.l.b16 %v173
    %v350 = vunpack.c.l.b16 %v174
    %v351 = vunpack.c.l.b16 %v175
    %v352 = vunpack.c.l.b16 %v176
    %v353 = vunpack.c.l.b16 %v177
    %v354 = vpack.c.b16 %v339, %v338
    %v355 = vpack.c.b16 %v341, %v340
    %v356 = vpack.c.b16 %v343, %v342
    %v357 = vpack.c.b16 %v345, %v344
    %v358 = vpack.c.b16 %v347, %v346
    %v359 = vpack.c.b16 %v349, %v348
    %v360 = vpack.c.b16 %v351, %v350
    %v361 = vpack.c.b16 %v353, %v352
    %370 = vmatprep.subr.bf16.mxu0 0
    %371 = vmatpush1.bf16.msra.mxu0 %v354
    %372 = vmatprep.subr.bf16.mxu0 0
    %373 = vmatpush1.bf16.msra.mxu0 %v355
    %374 = vmatprep.subr.bf16.mxu0 0
    %375 = vmatpush1.bf16.msra.mxu0 %v356
    %376 = vmatprep.subr.bf16.mxu0 0
    %377 = vmatpush1.bf16.msra.mxu0 %v357
    %378 = vmatprep.subr.bf16.mxu0 0
    %379 = vmatpush1.bf16.msra.mxu0 %v358
    %380 = vmatprep.subr.bf16.mxu0 0
    %381 = vmatpush1.bf16.msra.mxu0 %v359
    %382 = vmatprep.subr.bf16.mxu0 0
    %383 = vmatpush1.bf16.msra.mxu0 %v360
    %384 = vmatprep.subr.bf16.mxu0 0
    %385 = vmatpush1.bf16.msra.mxu0 %v361
    %386 = vmatprep.subr.bf16.mxu0 0
    %387 = vmatpush1.bf16.msra.mxu0 0
    %388 = vmatprep.subr.bf16.mxu0 0
    %389 = vmatpush1.bf16.msra.mxu0 0
    %390 = vmatprep.subr.bf16.mxu0 0
    %391 = vmatpush1.bf16.msra.mxu0 0
    %392 = vmatprep.subr.bf16.mxu0 0
    %393 = vmatpush1.bf16.msra.mxu0 0
    %394 = vmatprep.subr.bf16.mxu0 0
    %395 = vmatpush1.bf16.msra.mxu0 0
    %396 = vmatprep.subr.bf16.mxu0 0
    %397 = vmatpush1.bf16.msra.mxu0 0
    %398 = vmatprep.subr.bf16.mxu0 0
    %399 = vmatpush1.bf16.msra.mxu0 0
    %400 = vmatprep.subr.bf16.mxu0 0
    %401 = vmatpush1.bf16.msra.mxu0 0
    %402 = vmatprep.mubr.bf16.mxu0 0
    %403 = vmatmul.mubr.bf16.gmra.mrb[0].mxu0 %v274
    %v404 = vpop.f32.mrb[0].mxu0
    %v405 = vadd.f32 0.0, %v404
    %v406 = vpop.f32.mrb[0].mxu0
    %v407 = vpop.f32.mrb[0].mxu0
    %v408 = vadd.f32 0.0, %v407
    %v409 = vpop.f32.mrb[0].mxu0
    %410 = vmatprep.mubr.bf16.mxu0 0
    %411 = vmatmul.mubr.bf16.gmra.mrb[0].mxu0 %v275
    %v412 = vpop.f32.mrb[0].mxu0
    %v413 = vadd.f32 0.0, %v412
    %v414 = vpop.f32.mrb[0].mxu0
    %v415 = vpop.f32.mrb[0].mxu0
    %v416 = vadd.f32 0.0, %v415
    %v417 = vpop.f32.mrb[0].mxu0
    %418 = vmatprep.mubr.bf16.mxu0 0
    %419 = vmatmul.mubr.bf16.gmra.mrb[0].mxu0 %v276
    %v420 = vpop.f32.mrb[0].mxu0
    %v421 = vadd.f32 0.0, %v420
    %v422 = vpop.f32.mrb[0].mxu0
    %v423 = vpop.f32.mrb[0].mxu0
    %v424 = vadd.f32 0.0, %v423
    %v425 = vpop.f32.mrb[0].mxu0
    %426 = vmatprep.mubr.bf16.mxu0 0
    %427 = vmatmul.mubr.bf16.gmra.mrb[0].mxu0 %v277
    %v428 = vpop.f32.mrb[0].mxu0
    %v429 = vadd.f32 0.0, %v428
    %v430 = vpop.f32.mrb[0].mxu0
    %v431 = vpop.f32.mrb[0].mxu0
    %v432 = vadd.f32 0.0, %v431
    %v433 = vpop.f32.mrb[0].mxu0
    %434 = vmatprep.mubr.bf16.mxu0 0
    %435 = vmatmul.mubr.bf16.gmra.mrb[0].mxu0 %v278
    %v436 = vpop.f32.mrb[0].mxu0
    %v437 = vadd.f32 0.0, %v436
    %v438 = vpop.f32.mrb[0].mxu0
    %v439 = vpop.f32.mrb[0].mxu0
    %v440 = vadd.f32 0.0, %v439
    %v441 = vpop.f32.mrb[0].mxu0
    %442 = vmatprep.mubr.bf16.mxu0 0
    %443 = vmatmul.mubr.bf16.gmra.mrb[0].mxu0 %v279
    %v444 = vpop.f32.mrb[0].mxu0
    %v445 = vadd.f32 0.0, %v444
    %v446 = vpop.f32.mrb[0].mxu0
    %v447 = vpop.f32.mrb[0].mxu0
    %v448 = vadd.f32 0.0, %v447
    %v449 = vpop.f32.mrb[0].mxu0
    %450 = vmatprep.mubr.bf16.mxu0 0
    %451 = vmatmul.mubr.bf16.gmra.mrb[0].mxu0 %v280
    %v452 = vpop.f32.mrb[0].mxu0
    %v453 = vadd.f32 0.0, %v452
    %v454 = vpop.f32.mrb[0].mxu0
    %v455 = vpop.f32.mrb[0].mxu0
    %v456 = vadd.f32 0.0, %v455
    %v457 = vpop.f32.mrb[0].mxu0
    %458 = vmatprep.mubr.bf16.mxu0 0
    %459 = vmatmul.mubr.bf16.gmra.mrb[0].mxu0 %v281
    %v460 = vpop.f32.mrb[0].mxu0
    %v461 = vadd.f32 0.0, %v460
    %v462 = vpop.f32.mrb[0].mxu0
    %v463 = vpop.f32.mrb[0].mxu0
    %v464 = vadd.f32 0.0, %v463
    %v465 = vpop.f32.mrb[0].mxu0
    %466 = vmatprep.mubr.bf16.mxu0 0
    %467 = vmatmul.mubr.bf16.gmra.mrb[0].mxu0 %v282
    %v468 = vpop.f32.mrb[0].mxu0
    %v469 = vadd.f32 0.0, %v468
    %v470 = vpop.f32.mrb[0].mxu0
    %v471 = vpop.f32.mrb[0].mxu0
    %v472 = vadd.f32 0.0, %v471
    %v473 = vpop.f32.mrb[0].mxu0
    %474 = vmatprep.mubr.bf16.mxu0 0
    %475 = vmatmul.mubr.bf16.gmra.mrb[0].mxu0 %v283
    %v476 = vpop.f32.mrb[0].mxu0
    %v477 = vadd.f32 0.0, %v476
    %v478 = vpop.f32.mrb[0].mxu0
    %v479 = vpop.f32.mrb[0].mxu0
    %v480 = vadd.f32 0.0, %v479
    %v481 = vpop.f32.mrb[0].mxu0
    %482 = vmatprep.mubr.bf16.mxu0 0
    %483 = vmatmul.mubr.bf16.gmra.mrb[0].mxu0 %v284
    %v484 = vpop.f32.mrb[0].mxu0
    %v485 = vadd.f32 0.0, %v484
    %v486 = vpop.f32.mrb[0].mxu0
    %v487 = vpop.f32.mrb[0].mxu0
    %v488 = vadd.f32 0.0, %v487
    %v489 = vpop.f32.mrb[0].mxu0
    %490 = vmatprep.mubr.bf16.mxu0 0
    %491 = vmatmul.mubr.bf16.gmra.mrb[0].mxu0 %v285
    %v492 = vpop.f32.mrb[0].mxu0
    %v493 = vadd.f32 0.0, %v492
    %v494 = vpop.f32.mrb[0].mxu0
    %v495 = vpop.f32.mrb[0].mxu0
    %v496 = vadd.f32 0.0, %v495
    %v497 = vpop.f32.mrb[0].mxu0
    %498 = vmatprep.mubr.bf16.mxu0 0
    %499 = vmatmul.mubr.bf16.gmra.mrb[0].mxu0 %v286
    %v500 = vpop.f32.mrb[0].mxu0
    %v501 = vadd.f32 0.0, %v500
    %v502 = vpop.f32.mrb[0].mxu0
    %v503 = vpop.f32.mrb[0].mxu0
    %v504 = vadd.f32 0.0, %v503
    %v505 = vpop.f32.mrb[0].mxu0
    %506 = vmatprep.mubr.bf16.mxu0 0
    %507 = vmatmul.mubr.bf16.gmra.mrb[0].mxu0 %v287
    %v508 = vpop.f32.mrb[0].mxu0
    %v509 = vadd.f32 0.0, %v508
    %v510 = vpop.f32.mrb[0].mxu0
    %v511 = vpop.f32.mrb[0].mxu0
    %v512 = vadd.f32 0.0, %v511
    %v513 = vpop.f32.mrb[0].mxu0
    %514 = vmatprep.mubr.bf16.mxu0 0
    %515 = vmatmul.mubr.bf16.gmra.mrb[0].mxu0 %v288
    %v516 = vpop.f32.mrb[0].mxu0
    %v517 = vadd.f32 0.0, %v516
    %v518 = vpop.f32.mrb[0].mxu0
    %v519 = vpop.f32.mrb[0].mxu0
    %v520 = vadd.f32 0.0, %v519
    %v521 = vpop.f32.mrb[0].mxu0
    %522 = vmatprep.mubr.bf16.mxu0 0
    %523 = vmatmul.mubr.bf16.gmra.mrb[0].mxu0 %v289
    %v524 = vpop.f32.mrb[0].mxu0
    %v525 = vadd.f32 0.0, %v524
    %v526 = vpop.f32.mrb[0].mxu0
    %v527 = vpop.f32.mrb[0].mxu0
    %v528 = vadd.f32 0.0, %v527
    %v529 = vpop.f32.mrb[0].mxu0
    %530 = vmatprep.mubr.bf16.mxu0 0
    %531 = vmatmul.mubr.bf16.gmra.mrb[0].mxu0 %v290
    %v532 = vpop.f32.mrb[0].mxu0
    %v533 = vadd.f32 0.0, %v532
    %v534 = vpop.f32.mrb[0].mxu0
    %v535 = vpop.f32.mrb[0].mxu0
    %v536 = vadd.f32 0.0, %v535
    %v537 = vpop.f32.mrb[0].mxu0
    %538 = vmatprep.mubr.bf16.mxu0 0
    %539 = vmatmul.mubr.bf16.gmra.mrb[0].mxu0 %v291
    %v540 = vpop.f32.mrb[0].mxu0
    %v541 = vadd.f32 0.0, %v540
    %v542 = vpop.f32.mrb[0].mxu0
    %v543 = vpop.f32.mrb[0].mxu0
    %v544 = vadd.f32 0.0, %v543
    %v545 = vpop.f32.mrb[0].mxu0
    %546 = vmatprep.mubr.bf16.mxu0 0
    %547 = vmatmul.mubr.bf16.gmra.mrb[0].mxu0 %v292
    %v548 = vpop.f32.mrb[0].mxu0
    %v549 = vadd.f32 0.0, %v548
    %v550 = vpop.f32.mrb[0].mxu0
    %v551 = vpop.f32.mrb[0].mxu0
    %v552 = vadd.f32 0.0, %v551
    %v553 = vpop.f32.mrb[0].mxu0
    %554 = vmatprep.mubr.bf16.mxu0 0
    %555 = vmatmul.mubr.bf16.gmra.mrb[0].mxu0 %v293
    %v556 = vpop.f32.mrb[0].mxu0
    %v557 = vadd.f32 0.0, %v556
    %v558 = vpop.f32.mrb[0].mxu0
    %v559 = vpop.f32.mrb[0].mxu0
    %v560 = vadd.f32 0.0, %v559
    %v561 = vpop.f32.mrb[0].mxu0
    %562 = vmatprep.mubr.bf16.mxu0 0
    %563 = vmatmul.mubr.bf16.gmra.mrb[0].mxu0 %v294
    %v564 = vpop.f32.mrb[0].mxu0
    %v565 = vadd.f32 0.0, %v564
    %v566 = vpop.f32.mrb[0].mxu0
    %v567 = vpop.f32.mrb[0].mxu0
    %v568 = vadd.f32 0.0, %v567
    %v569 = vpop.f32.mrb[0].mxu0
    %570 = vmatprep.mubr.bf16.mxu0 0
    %571 = vmatmul.mubr.bf16.gmra.mrb[0].mxu0 %v295
    %v572 = vpop.f32.mrb[0].mxu0
    %v573 = vadd.f32 0.0, %v572
    %v574 = vpop.f32.mrb[0].mxu0
    %v575 = vpop.f32.mrb[0].mxu0
    %v576 = vadd.f32 0.0, %v575
    %v577 = vpop.f32.mrb[0].mxu0
    %578 = vmatprep.mubr.bf16.mxu0 0
    %579 = vmatmul.mubr.bf16.gmra.mrb[0].mxu0 %v296
    %v580 = vpop.f32.mrb[0].mxu0
    %v581 = vadd.f32 0.0, %v580
    %v582 = vpop.f32.mrb[0].mxu0
    %v583 = vpop.f32.mrb[0].mxu0
    %v584 = vadd.f32 0.0, %v583
    %v585 = vpop.f32.mrb[0].mxu0
    %586 = vmatprep.mubr.bf16.mxu0 0
    %587 = vmatmul.mubr.bf16.gmra.mrb[0].mxu0 %v297
    %v588 = vpop.f32.mrb[0].mxu0
    %v589 = vadd.f32 0.0, %v588
    %v590 = vpop.f32.mrb[0].mxu0
    %v591 = vpop.f32.mrb[0].mxu0
    %v592 = vadd.f32 0.0, %v591
    %v593 = vpop.f32.mrb[0].mxu0
    %594 = vdwg.mxu0
    %v595 = vld [vmem:[#allocation2] sm:$0xff]
    %v596 = vld [vmem:[#allocation2 + $0x8] sm:$0xf]
    %v597 = vld [vmem:[#allocation2 + $0xc] sm:$0xff]
    %v598 = vld [vmem:[#allocation2 + $0x14] sm:$0xf]
    %v599 = vld [vmem:[#allocation2 + $0x18] sm:$0xff]
    %v600 = vld [vmem:[#allocation2 + $0x20] sm:$0xf]
    %v601 = vld [vmem:[#allocation2 + $0x24] sm:$0xff]
    %v602 = vld [vmem:[#allocation2 + $0x2c] sm:$0xf]
    %v603 = vld [vmem:[#allocation2 + $0x30] sm:$0xff]
    %v604 = vld [vmem:[#allocation2 + $0x38] sm:$0xf]
    %v605 = vld [vmem:[#allocation2 + $0x3c] sm:$0xff]
    %v606 = vld [vmem:[#allocation2 + $0x44] sm:$0xf]
    %v607 = vld [vmem:[#allocation2 + $0x48] sm:$0xff]
    %v608 = vld [vmem:[#allocation2 + $0x50] sm:$0xf]
    %v609 = vld [vmem:[#allocation2 + $0x54] sm:$0xff]
    %v610 = vld [vmem:[#allocation2 + $0x5c] sm:$0xf]
    %v611 = vld [vmem:[#allocation2 + $0x60] sm:$0xff]
    %v612 = vld [vmem:[#allocation2 + $0x68] sm:$0xf]
    %v613 = vld [vmem:[#allocation2 + $0x6c] sm:$0xff]
    %v614 = vld [vmem:[#allocation2 + $0x74] sm:$0xf]
    %v615 = vld [vmem:[#allocation2 + $0x78] sm:$0xff]
    %v616 = vld [vmem:[#allocation2 + $0x80] sm:$0xf]
    %v617 = vld [vmem:[#allocation2 + $0x84] sm:$0xff]
    %v618 = vld [vmem:[#allocation2 + $0x8c] sm:$0xf]
    %v619 = vld [vmem:[#allocation2 + $0x90] sm:$0xff]
    %v620 = vld [vmem:[#allocation2 + $0x98] sm:$0xf]
    %v621 = vld [vmem:[#allocation2 + $0x9c] sm:$0xff]
    %v622 = vld [vmem:[#allocation2 + $0xa4] sm:$0xf]
    %v623 = vld [vmem:[#allocation2 + $0xa8] sm:$0xff]
    %v624 = vld [vmem:[#allocation2 + $0xb0] sm:$0xf]
    %v625 = vld [vmem:[#allocation2 + $0xb4] sm:$0xff]
    %v626 = vld [vmem:[#allocation2 + $0xbc] sm:$0xf]
    %v627 = vld [vmem:[#allocation2 + $0xc0] sm:$0xff]
    %v628 = vld [vmem:[#allocation2 + $0xc8] sm:$0xf]
    %v629 = vld [vmem:[#allocation2 + $0xcc] sm:$0xff]
    %v630 = vld [vmem:[#allocation2 + $0xd4] sm:$0xf]
    %v631 = vld [vmem:[#allocation2 + $0xd8] sm:$0xff]
    %v632 = vld [vmem:[#allocation2 + $0xe0] sm:$0xf]
    %v633 = vld [vmem:[#allocation2 + $0xe4] sm:$0xff]
    %v634 = vld [vmem:[#allocation2 + $0xec] sm:$0xf]
    %v635 = vld [vmem:[#allocation2 + $0xf0] sm:$0xff]
    %v636 = vld [vmem:[#allocation2 + $0xf8] sm:$0xf]
    %v637 = vld [vmem:[#allocation2 + $0xfc] sm:$0xff]
    %v638 = vld [vmem:[#allocation2 + $0x104] sm:$0xf]
    %v639 = vld [vmem:[#allocation2 + $0x108] sm:$0xff]
    %v640 = vld [vmem:[#allocation2 + $0x110] sm:$0xf]
    %v641 = vld [vmem:[#allocation2 + $0x114] sm:$0xff]
    %v642 = vld [vmem:[#allocation2 + $0x11c] sm:$0xf]
    %v643 = vld [vmem:[#allocation2 + $0x120] sm:$0xff]
    %v644 = vld [vmem:[#allocation2 + $0x128] sm:$0xf]
    %v645 = vld [vmem:[#allocation2 + $0x12c] sm:$0xff]
    %v646 = vld [vmem:[#allocation2 + $0x134] sm:$0xf]
    %v647 = vld [vmem:[#allocation2 + $0x138] sm:$0xff]
    %v648 = vld [vmem:[#allocation2 + $0x140] sm:$0xf]
    %v649 = vld [vmem:[#allocation2 + $0x144] sm:$0xff]
    %v650 = vld [vmem:[#allocation2 + $0x14c] sm:$0xf]
    %v651 = vld [vmem:[#allocation2 + $0x150] sm:$0xff]
    %v652 = vld [vmem:[#allocation2 + $0x158] sm:$0xf]
    %v653 = vld [vmem:[#allocation2 + $0x15c] sm:$0xff]
    %v654 = vld [vmem:[#allocation2 + $0x164] sm:$0xf]
    %v655 = vld [vmem:[#allocation2 + $0x168] sm:$0xff]
    %v656 = vld [vmem:[#allocation2 + $0x170] sm:$0xf]
    %v657 = vld [vmem:[#allocation2 + $0x174] sm:$0xff]
    %v658 = vld [vmem:[#allocation2 + $0x17c] sm:$0xf]
    %v659 = vld [vmem:[#allocation2 + $0x180] sm:$0xff]
    %v660 = vld [vmem:[#allocation2 + $0x188] sm:$0xf]
    %v661 = vld [vmem:[#allocation2 + $0x18c] sm:$0xff]
    %v662 = vld [vmem:[#allocation2 + $0x194] sm:$0xf]
    %v663 = vld [vmem:[#allocation2 + $0x198] sm:$0xff]
    %v664 = vld [vmem:[#allocation2 + $0x1a0] sm:$0xf]
    %v665 = vld [vmem:[#allocation2 + $0x1a4] sm:$0xff]
    %v666 = vld [vmem:[#allocation2 + $0x1ac] sm:$0xf]
    %v667 = vld [vmem:[#allocation2 + $0x1b0] sm:$0xff]
    %v668 = vld [vmem:[#allocation2 + $0x1b8] sm:$0xf]
    %v669 = vld [vmem:[#allocation2 + $0x1bc] sm:$0xff]
    %v670 = vld [vmem:[#allocation2 + $0x1c4] sm:$0xf]
    %v671 = vld [vmem:[#allocation2 + $0x1c8] sm:$0xff]
    %v672 = vld [vmem:[#allocation2 + $0x1d0] sm:$0xf]
    %v673 = vld [vmem:[#allocation2 + $0x1d4] sm:$0xff]
    %v674 = vld [vmem:[#allocation2 + $0x1dc] sm:$0xf]
    %v675 = vld [vmem:[#allocation2 + $0x1e0] sm:$0xff]
    %v676 = vld [vmem:[#allocation2 + $0x1e8] sm:$0xf]
    %v677 = vld [vmem:[#allocation2 + $0x1ec] sm:$0xff]
    %v678 = vld [vmem:[#allocation2 + $0x1f4] sm:$0xf]
    %v679 = vld [vmem:[#allocation2 + $0x1f8] sm:$0xff]
    %v680 = vld [vmem:[#allocation2 + $0x200] sm:$0xf]
    %v681 = vld [vmem:[#allocation2 + $0x204] sm:$0xff]
    %v682 = vld [vmem:[#allocation2 + $0x20c] sm:$0xf]
    %v683 = vld [vmem:[#allocation2 + $0x210] sm:$0xff]
    %v684 = vld [vmem:[#allocation2 + $0x218] sm:$0xf]
    %v685 = vld [vmem:[#allocation2 + $0x21c] sm:$0xff]
    %v686 = vld [vmem:[#allocation2 + $0x224] sm:$0xf]
    %v687 = vld [vmem:[#allocation2 + $0x228] sm:$0xff]
    %v688 = vld [vmem:[#allocation2 + $0x230] sm:$0xf]
    %v689 = vld [vmem:[#allocation2 + $0x234] sm:$0xff]
    %v690 = vld [vmem:[#allocation2 + $0x23c] sm:$0xf]
    %v691 = vpack.c.bf16 %v408, %v405
    %v692 = vpack.c.bf16 %v416, %v413
    %v693 = vpack.c.bf16 %v424, %v421
    %v694 = vpack.c.bf16 %v432, %v429
    %v695 = vpack.c.bf16 %v440, %v437
    %v696 = vpack.c.bf16 %v448, %v445
    %v697 = vpack.c.bf16 %v456, %v453
    %v698 = vpack.c.bf16 %v464, %v461
    %v699 = vpack.c.bf16 %v472, %v469
    %v700 = vpack.c.bf16 %v480, %v477
    %v701 = vpack.c.bf16 %v488, %v485
    %v702 = vpack.c.bf16 %v496, %v493
    %v703 = vpack.c.bf16 %v504, %v501
    %v704 = vpack.c.bf16 %v512, %v509
    %v705 = vpack.c.bf16 %v520, %v517
    %v706 = vpack.c.bf16 %v528, %v525
    %v707 = vpack.c.bf16 %v536, %v533
    %v708 = vpack.c.bf16 %v544, %v541
    %v709 = vpack.c.bf16 %v552, %v549
    %v710 = vpack.c.bf16 %v560, %v557
    %v711 = vpack.c.bf16 %v568, %v565
    %v712 = vpack.c.bf16 %v576, %v573
    %v713 = vpack.c.bf16 %v584, %v581
    %v714 = vpack.c.bf16 %v592, %v589
    %v715 = vld [vmem:[%s4] sm:$0x1]
    %v717 = vlaneseq
    %v718 = vshrl.u32 %v717, 7
    %v719 = vsub.s32 0, %v718
    %v720 = vrot.slane %v715, %v719
    %v818 = vunpack.c.l.b16 %v595
    %v819 = vunpack.c.h.b16 %v595
    %v820 = vunpack.c.l.b16 %v596
    %v821 = vunpack.c.l.b16 %v597
    %v822 = vunpack.c.h.b16 %v597
    %v823 = vunpack.c.l.b16 %v598
    %v824 = vunpack.c.l.b16 %v599
    %v825 = vunpack.c.h.b16 %v599
    %v826 = vunpack.c.l.b16 %v600
    %v827 = vunpack.c.l.b16 %v601
    %v828 = vunpack.c.h.b16 %v601
    %v829 = vunpack.c.l.b16 %v602
    %v830 = vunpack.c.l.b16 %v603
    %v831 = vunpack.c.h.b16 %v603
    %v832 = vunpack.c.l.b16 %v604
    %v833 = vunpack.c.l.b16 %v605
    %v834 = vunpack.c.h.b16 %v605
    %v835 = vunpack.c.l.b16 %v606
    %v836 = vunpack.c.l.b16 %v607
    %v837 = vunpack.c.h.b16 %v607
    %v838 = vunpack.c.l.b16 %v608
    %v839 = vunpack.c.l.b16 %v609
    %v840 = vunpack.c.h.b16 %v609
    %v841 = vunpack.c.l.b16 %v610
    %v842 = vunpack.c.l.b16 %v611
    %v843 = vunpack.c.h.b16 %v611
    %v844 = vunpack.c.l.b16 %v612
    %v845 = vunpack.c.l.b16 %v613
    %v846 = vunpack.c.h.b16 %v613
    %v847 = vunpack.c.l.b16 %v614
    %v848 = vunpack.c.l.b16 %v615
    %v849 = vunpack.c.h.b16 %v615
    %v850 = vunpack.c.l.b16 %v616
    %v851 = vunpack.c.l.b16 %v617
    %v852 = vunpack.c.h.b16 %v617
    %v853 = vunpack.c.l.b16 %v618
    %v854 = vunpack.c.l.b16 %v619
    %v855 = vunpack.c.h.b16 %v619
    %v856 = vunpack.c.l.b16 %v620
    %v857 = vunpack.c.l.b16 %v621
    %v858 = vunpack.c.h.b16 %v621
    %v859 = vunpack.c.l.b16 %v622
    %v860 = vunpack.c.l.b16 %v623
    %v861 = vunpack.c.h.b16 %v623
    %v862 = vunpack.c.l.b16 %v624
    %v863 = vunpack.c.l.b16 %v625
    %v864 = vunpack.c.h.b16 %v625
    %v865 = vunpack.c.l.b16 %v626
    %v866 = vunpack.c.l.b16 %v627
    %v867 = vunpack.c.h.b16 %v627
    %v868 = vunpack.c.l.b16 %v628
    %v869 = vunpack.c.l.b16 %v629
    %v870 = vunpack.c.h.b16 %v629
    %v871 = vunpack.c.l.b16 %v630
    %v872 = vunpack.c.l.b16 %v631
    %v873 = vunpack.c.h.b16 %v631
    %v874 = vunpack.c.l.b16 %v632
    %v875 = vunpack.c.l.b16 %v633
    %v876 = vunpack.c.h.b16 %v633
    %v877 = vunpack.c.l.b16 %v634
    %v878 = vunpack.c.l.b16 %v635
    %v879 = vunpack.c.h.b16 %v635
    %v880 = vunpack.c.l.b16 %v636
    %v881 = vunpack.c.l.b16 %v637
    %v882 = vunpack.c.h.b16 %v637
    %v883 = vunpack.c.l.b16 %v638
    %v884 = vunpack.c.l.b16 %v639
    %v885 = vunpack.c.h.b16 %v639
    %v886 = vunpack.c.l.b16 %v640
    %v887 = vunpack.c.l.b16 %v641
    %v888 = vunpack.c.h.b16 %v641
    %v889 = vunpack.c.l.b16 %v642
    %v890 = vunpack.c.l.b16 %v643
    %v891 = vunpack.c.h.b16 %v643
    %v892 = vunpack.c.l.b16 %v644
    %v893 = vunpack.c.l.b16 %v645
    %v894 = vunpack.c.h.b16 %v645
    %v895 = vunpack.c.l.b16 %v646
    %v896 = vunpack.c.l.b16 %v647
    %v897 = vunpack.c.h.b16 %v647
    %v898 = vunpack.c.l.b16 %v648
    %v899 = vunpack.c.l.b16 %v649
    %v900 = vunpack.c.h.b16 %v649
    %v901 = vunpack.c.l.b16 %v650
    %v902 = vunpack.c.l.b16 %v651
    %v903 = vunpack.c.h.b16 %v651
    %v904 = vunpack.c.l.b16 %v652
    %v905 = vunpack.c.l.b16 %v653
    %v906 = vunpack.c.h.b16 %v653
    %v907 = vunpack.c.l.b16 %v654
    %v908 = vunpack.c.l.b16 %v655
    %v909 = vunpack.c.h.b16 %v655
    %v910 = vunpack.c.l.b16 %v656
    %v911 = vunpack.c.l.b16 %v657
    %v912 = vunpack.c.h.b16 %v657
    %v913 = vunpack.c.l.b16 %v658
    %v914 = vunpack.c.l.b16 %v659
    %v915 = vunpack.c.h.b16 %v659
    %v916 = vunpack.c.l.b16 %v660
    %v917 = vunpack.c.l.b16 %v661
    %v918 = vunpack.c.h.b16 %v661
    %v919 = vunpack.c.l.b16 %v662
    %v920 = vunpack.c.l.b16 %v663
    %v921 = vunpack.c.h.b16 %v663
    %v922 = vunpack.c.l.b16 %v664
    %v923 = vunpack.c.l.b16 %v665
    %v924 = vunpack.c.h.b16 %v665
    %v925 = vunpack.c.l.b16 %v666
    %v926 = vunpack.c.l.b16 %v667
    %v927 = vunpack.c.h.b16 %v667
    %v928 = vunpack.c.l.b16 %v668
    %v929 = vunpack.c.l.b16 %v669
    %v930 = vunpack.c.h.b16 %v669
    %v931 = vunpack.c.l.b16 %v670
    %v932 = vunpack.c.l.b16 %v671
    %v933 = vunpack.c.h.b16 %v671
    %v934 = vunpack.c.l.b16 %v672
    %v935 = vunpack.c.l.b16 %v673
    %v936 = vunpack.c.h.b16 %v673
    %v937 = vunpack.c.l.b16 %v674
    %v938 = vunpack.c.l.b16 %v675
    %v939 = vunpack.c.h.b16 %v675
    %v940 = vunpack.c.l.b16 %v676
    %v941 = vunpack.c.l.b16 %v677
    %v942 = vunpack.c.h.b16 %v677
    %v943 = vunpack.c.l.b16 %v678
    %v944 = vunpack.c.l.b16 %v679
    %v945 = vunpack.c.h.b16 %v679
    %v946 = vunpack.c.l.b16 %v680
    %v947 = vunpack.c.l.b16 %v681
    %v948 = vunpack.c.h.b16 %v681
    %v949 = vunpack.c.l.b16 %v682
    %v950 = vunpack.c.l.b16 %v683
    %v951 = vunpack.c.h.b16 %v683
    %v952 = vunpack.c.l.b16 %v684
    %v953 = vunpack.c.l.b16 %v685
    %v954 = vunpack.c.h.b16 %v685
    %v955 = vunpack.c.l.b16 %v686
    %v956 = vunpack.c.l.b16 %v687
    %v957 = vunpack.c.h.b16 %v687
    %v958 = vunpack.c.l.b16 %v688
    %v959 = vunpack.c.l.b16 %v689
    %v960 = vunpack.c.h.b16 %v689
    %v961 = vunpack.c.l.b16 %v690
    %v962 = vpack.c.b16 %v821, %v818
    %v963 = vpack.c.b16 %v822, %v819
    %v964 = vpack.c.b16 %v823, %v820
    %v965 = vpack.c.b16 %v827, %v824
    %v966 = vpack.c.b16 %v828, %v825
    %v967 = vpack.c.b16 %v829, %v826
    %v968 = vpack.c.b16 %v833, %v830
    %v969 = vpack.c.b16 %v834, %v831
    %v970 = vpack.c.b16 %v835, %v832
    %v971 = vpack.c.b16 %v839, %v836
    %v972 = vpack.c.b16 %v840, %v837
    %v973 = vpack.c.b16 %v841, %v838
    %v974 = vpack.c.b16 %v845, %v842
    %v975 = vpack.c.b16 %v846, %v843
    %v976 = vpack.c.b16 %v847, %v844
    %v977 = vpack.c.b16 %v851, %v848
    %v978 = vpack.c.b16 %v852, %v849
    %v979 = vpack.c.b16 %v853, %v850
    %v980 = vpack.c.b16 %v857, %v854
    %v981 = vpack.c.b16 %v858, %v855
    %v982 = vpack.c.b16 %v859, %v856
    %v983 = vpack.c.b16 %v863, %v860
    %v984 = vpack.c.b16 %v864, %v861
    %v985 = vpack.c.b16 %v865, %v862
    %v986 = vpack.c.b16 %v869, %v866
    %v987 = vpack.c.b16 %v870, %v867
    %v988 = vpack.c.b16 %v871, %v868
    %v989 = vpack.c.b16 %v875, %v872
    %v990 = vpack.c.b16 %v876, %v873
    %v991 = vpack.c.b16 %v877, %v874
    %v992 = vpack.c.b16 %v881, %v878
    %v993 = vpack.c.b16 %v882, %v879
    %v994 = vpack.c.b16 %v883, %v880
    %v995 = vpack.c.b16 %v887, %v884
    %v996 = vpack.c.b16 %v888, %v885
    %v997 = vpack.c.b16 %v889, %v886
    %v998 = vpack.c.b16 %v893, %v890
    %v999 = vpack.c.b16 %v894, %v891
    %v1000 = vpack.c.b16 %v895, %v892
    %v1001 = vpack.c.b16 %v899, %v896
    %v1002 = vpack.c.b16 %v900, %v897
    %v1003 = vpack.c.b16 %v901, %v898
    %v1004 = vpack.c.b16 %v905, %v902
    %v1005 = vpack.c.b16 %v906, %v903
    %v1006 = vpack.c.b16 %v907, %v904
    %v1007 = vpack.c.b16 %v911, %v908
    %v1008 = vpack.c.b16 %v912, %v909
    %v1009 = vpack.c.b16 %v913, %v910
    %v1010 = vpack.c.b16 %v917, %v914
    %v1011 = vpack.c.b16 %v918, %v915
    %v1012 = vpack.c.b16 %v919, %v916
    %v1013 = vpack.c.b16 %v923, %v920
    %v1014 = vpack.c.b16 %v924, %v921
    %v1015 = vpack.c.b16 %v925, %v922
    %v1016 = vpack.c.b16 %v929, %v926
    %v1017 = vpack.c.b16 %v930, %v927
    %v1018 = vpack.c.b16 %v931, %v928
    %v1019 = vpack.c.b16 %v935, %v932
    %v1020 = vpack.c.b16 %v936, %v933
    %v1021 = vpack.c.b16 %v937, %v934
    %v1022 = vpack.c.b16 %v941, %v938
    %v1023 = vpack.c.b16 %v942, %v939
    %v1024 = vpack.c.b16 %v943, %v940
    %v1025 = vpack.c.b16 %v947, %v944
    %v1026 = vpack.c.b16 %v948, %v945
    %v1027 = vpack.c.b16 %v949, %v946
    %v1028 = vpack.c.b16 %v953, %v950
    %v1029 = vpack.c.b16 %v954, %v951
    %v1030 = vpack.c.b16 %v955, %v952
    %v1031 = vpack.c.b16 %v959, %v956
    %v1032 = vpack.c.b16 %v960, %v957
    %v1033 = vpack.c.b16 %v961, %v958
    %1106 = vmatprep.subr.bf16.mxu0 0
    %1107 = vmatpush1.bf16.msra.mxu0 %v691
    %1108 = vmatprep.subr.bf16.mxu0 0
    %1109 = vmatpush1.bf16.msra.mxu0 %v692
    %1110 = vmatprep.subr.bf16.mxu0 0
    %1111 = vmatpush1.bf16.msra.mxu0 %v693
    %1112 = vmatprep.subr.bf16.mxu0 0
    %1113 = vmatpush1.bf16.msra.mxu0 %v694
    %1114 = vmatprep.subr.bf16.mxu0 0
    %1115 = vmatpush1.bf16.msra.mxu0 %v695
    %1116 = vmatprep.subr.bf16.mxu0 0
    %1117 = vmatpush1.bf16.msra.mxu0 %v696
    %1118 = vmatprep.subr.bf16.mxu0 0
    %1119 = vmatpush1.bf16.msra.mxu0 %v697
    %1120 = vmatprep.subr.bf16.mxu0 0
    %1121 = vmatpush1.bf16.msra.mxu0 %v698
    %1122 = vmatprep.subr.bf16.mxu0 0
    %1123 = vmatpush1.bf16.msra.mxu0 %v699
    %1124 = vmatprep.subr.bf16.mxu0 0
    %1125 = vmatpush1.bf16.msra.mxu0 %v700
    %1126 = vmatprep.subr.bf16.mxu0 0
    %1127 = vmatpush1.bf16.msra.mxu0 %v701
    %1128 = vmatprep.subr.bf16.mxu0 0
    %1129 = vmatpush1.bf16.msra.mxu0 %v702
    %1130 = vmatprep.subr.bf16.mxu0 0
    %1131 = vmatpush1.bf16.msra.mxu0 %v703
    %1132 = vmatprep.subr.bf16.mxu0 0
    %1133 = vmatpush1.bf16.msra.mxu0 %v704
    %1134 = vmatprep.subr.bf16.mxu0 0
    %1135 = vmatpush1.bf16.msra.mxu0 %v705
    %1136 = vmatprep.subr.bf16.mxu0 0
    %1137 = vmatpush1.bf16.msra.mxu0 %v706
    %1138 = vmatprep.mubr.bf16.mxu0 %v963
    %1139 = vmatmul.mubr.bf16.gmra.mrb[0].mxu0 %v962
    %v1140 = vpop.f32.mrb[0].mxu0
    %v1141 = vadd.f32 %v720, %v1140
    %v1142 = vpop.f32.mrb[0].mxu0
    %v1143 = vpop.f32.mrb[0].mxu0
    %v1144 = vadd.f32 %v720, %v1143
    %v1145 = vpop.f32.mrb[0].mxu0
    %1146 = vmatprep.mubr.bf16.mxu0 %v966
    %1147 = vmatmul.mubr.bf16.gmra.mrb[0].mxu0 %v965
    %v1148 = vpop.f32.mrb[0].mxu0
    %v1149 = vadd.f32 %v720, %v1148
    %v1150 = vpop.f32.mrb[0].mxu0
    %v1151 = vpop.f32.mrb[0].mxu0
    %v1152 = vadd.f32 %v720, %v1151
    %v1153 = vpop.f32.mrb[0].mxu0
    %1154 = vmatprep.mubr.bf16.mxu0 %v969
    %1155 = vmatmul.mubr.bf16.gmra.mrb[0].mxu0 %v968
    %v1156 = vpop.f32.mrb[0].mxu0
    %v1157 = vadd.f32 %v720, %v1156
    %v1158 = vpop.f32.mrb[0].mxu0
    %v1159 = vpop.f32.mrb[0].mxu0
    %v1160 = vadd.f32 %v720, %v1159
    %v1161 = vpop.f32.mrb[0].mxu0
    %1162 = vmatprep.mubr.bf16.mxu0 %v972
    %1163 = vmatmul.mubr.bf16.gmra.mrb[0].mxu0 %v971
    %v1164 = vpop.f32.mrb[0].mxu0
    %v1165 = vadd.f32 %v720, %v1164
    %v1166 = vpop.f32.mrb[0].mxu0
    %v1167 = vpop.f32.mrb[0].mxu0
    %v1168 = vadd.f32 %v720, %v1167
    %v1169 = vpop.f32.mrb[0].mxu0
    %1170 = vmatprep.mubr.bf16.mxu0 %v975
    %1171 = vmatmul.mubr.bf16.gmra.mrb[0].mxu0 %v974
    %v1172 = vpop.f32.mrb[0].mxu0
    %v1173 = vadd.f32 %v720, %v1172
    %v1174 = vpop.f32.mrb[0].mxu0
    %v1175 = vpop.f32.mrb[0].mxu0
    %v1176 = vadd.f32 %v720, %v1175
    %v1177 = vpop.f32.mrb[0].mxu0
    %1178 = vmatprep.mubr.bf16.mxu0 %v978
    %1179 = vmatmul.mubr.bf16.gmra.mrb[0].mxu0 %v977
    %v1180 = vpop.f32.mrb[0].mxu0
    %v1181 = vadd.f32 %v720, %v1180
    %v1182 = vpop.f32.mrb[0].mxu0
    %v1183 = vpop.f32.mrb[0].mxu0
    %v1184 = vadd.f32 %v720, %v1183
    %v1185 = vpop.f32.mrb[0].mxu0
    %1186 = vmatprep.mubr.bf16.mxu0 %v981
    %1187 = vmatmul.mubr.bf16.gmra.mrb[0].mxu0 %v980
    %v1188 = vpop.f32.mrb[0].mxu0
    %v1189 = vadd.f32 %v720, %v1188
    %v1190 = vpop.f32.mrb[0].mxu0
    %v1191 = vpop.f32.mrb[0].mxu0
    %v1192 = vadd.f32 %v720, %v1191
    %v1193 = vpop.f32.mrb[0].mxu0
    %1194 = vmatprep.mubr.bf16.mxu0 %v984
    %1195 = vmatmul.mubr.bf16.gmra.mrb[0].mxu0 %v983
    %v1196 = vpop.f32.mrb[0].mxu0
    %v1197 = vadd.f32 %v720, %v1196
    %v1198 = vpop.f32.mrb[0].mxu0
    %v1199 = vpop.f32.mrb[0].mxu0
    %v1200 = vadd.f32 %v720, %v1199
    %v1201 = vpop.f32.mrb[0].mxu0
    %1202 = vmatprep.mubr.bf16.mxu0 %v987
    %1203 = vmatmul.mubr.bf16.gmra.mrb[0].mxu0 %v986
    %v1204 = vpop.f32.mrb[0].mxu0
    %v1205 = vadd.f32 %v720, %v1204
    %v1206 = vpop.f32.mrb[0].mxu0
    %v1207 = vpop.f32.mrb[0].mxu0
    %v1208 = vadd.f32 %v720, %v1207
    %v1209 = vpop.f32.mrb[0].mxu0
    %1210 = vmatprep.mubr.bf16.mxu0 %v990
    %1211 = vmatmul.mubr.bf16.gmra.mrb[0].mxu0 %v989
    %v1212 = vpop.f32.mrb[0].mxu0
    %v1213 = vadd.f32 %v720, %v1212
    %v1214 = vpop.f32.mrb[0].mxu0
    %v1215 = vpop.f32.mrb[0].mxu0
    %v1216 = vadd.f32 %v720, %v1215
    %v1217 = vpop.f32.mrb[0].mxu0
    %1218 = vmatprep.mubr.bf16.mxu0 %v993
    %1219 = vmatmul.mubr.bf16.gmra.mrb[0].mxu0 %v992
    %v1220 = vpop.f32.mrb[0].mxu0
    %v1221 = vadd.f32 %v720, %v1220
    %v1222 = vpop.f32.mrb[0].mxu0
    %v1223 = vpop.f32.mrb[0].mxu0
    %v1224 = vadd.f32 %v720, %v1223
    %v1225 = vpop.f32.mrb[0].mxu0
    %1226 = vmatprep.mubr.bf16.mxu0 %v996
    %1227 = vmatmul.mubr.bf16.gmra.mrb[0].mxu0 %v995
    %v1228 = vpop.f32.mrb[0].mxu0
    %v1229 = vadd.f32 %v720, %v1228
    %v1230 = vpop.f32.mrb[0].mxu0
    %v1231 = vpop.f32.mrb[0].mxu0
    %v1232 = vadd.f32 %v720, %v1231
    %v1233 = vpop.f32.mrb[0].mxu0
    %1234 = vmatprep.mubr.bf16.mxu0 %v999
    %1235 = vmatmul.mubr.bf16.gmra.mrb[0].mxu0 %v998
    %v1236 = vpop.f32.mrb[0].mxu0
    %v1237 = vadd.f32 %v720, %v1236
    %v1238 = vpop.f32.mrb[0].mxu0
    %v1239 = vpop.f32.mrb[0].mxu0
    %v1240 = vadd.f32 %v720, %v1239
    %v1241 = vpop.f32.mrb[0].mxu0
    %1242 = vmatprep.mubr.bf16.mxu0 %v1002
    %1243 = vmatmul.mubr.bf16.gmra.mrb[0].mxu0 %v1001
    %v1244 = vpop.f32.mrb[0].mxu0
    %v1245 = vadd.f32 %v720, %v1244
    %v1246 = vpop.f32.mrb[0].mxu0
    %v1247 = vpop.f32.mrb[0].mxu0
    %v1248 = vadd.f32 %v720, %v1247
    %v1249 = vpop.f32.mrb[0].mxu0
    %1250 = vmatprep.mubr.bf16.mxu0 %v1005
    %1251 = vmatmul.mubr.bf16.gmra.mrb[0].mxu0 %v1004
    %v1252 = vpop.f32.mrb[0].mxu0
    %v1253 = vadd.f32 %v720, %v1252
    %v1254 = vpop.f32.mrb[0].mxu0
    %v1255 = vpop.f32.mrb[0].mxu0
    %v1256 = vadd.f32 %v720, %v1255
    %v1257 = vpop.f32.mrb[0].mxu0
    %1258 = vmatprep.mubr.bf16.mxu0 %v1008
    %1259 = vmatmul.mubr.bf16.gmra.mrb[0].mxu0 %v1007
    %v1260 = vpop.f32.mrb[0].mxu0
    %v1261 = vadd.f32 %v720, %v1260
    %v1262 = vpop.f32.mrb[0].mxu0
    %v1263 = vpop.f32.mrb[0].mxu0
    %v1264 = vadd.f32 %v720, %v1263
    %v1265 = vpop.f32.mrb[0].mxu0
    %1266 = vmatprep.mubr.bf16.mxu0 %v1011
    %1267 = vmatmul.mubr.bf16.gmra.mrb[0].mxu0 %v1010
    %v1268 = vpop.f32.mrb[0].mxu0
    %v1269 = vadd.f32 %v720, %v1268
    %v1270 = vpop.f32.mrb[0].mxu0
    %v1271 = vpop.f32.mrb[0].mxu0
    %v1272 = vadd.f32 %v720, %v1271
    %v1273 = vpop.f32.mrb[0].mxu0
    %1274 = vmatprep.mubr.bf16.mxu0 %v1014
    %1275 = vmatmul.mubr.bf16.gmra.mrb[0].mxu0 %v1013
    %v1276 = vpop.f32.mrb[0].mxu0
    %v1277 = vadd.f32 %v720, %v1276
    %v1278 = vpop.f32.mrb[0].mxu0
    %v1279 = vpop.f32.mrb[0].mxu0
    %v1280 = vadd.f32 %v720, %v1279
    %v1281 = vpop.f32.mrb[0].mxu0
    %1282 = vmatprep.mubr.bf16.mxu0 %v1017
    %1283 = vmatmul.mubr.bf16.gmra.mrb[0].mxu0 %v1016
    %v1284 = vpop.f32.mrb[0].mxu0
    %v1285 = vadd.f32 %v720, %v1284
    %v1286 = vpop.f32.mrb[0].mxu0
    %v1287 = vpop.f32.mrb[0].mxu0
    %v1288 = vadd.f32 %v720, %v1287
    %v1289 = vpop.f32.mrb[0].mxu0
    %1290 = vmatprep.mubr.bf16.mxu0 %v1020
    %1291 = vmatmul.mubr.bf16.gmra.mrb[0].mxu0 %v1019
    %v1292 = vpop.f32.mrb[0].mxu0
    %v1293 = vadd.f32 %v720, %v1292
    %v1294 = vpop.f32.mrb[0].mxu0
    %v1295 = vpop.f32.mrb[0].mxu0
    %v1296 = vadd.f32 %v720, %v1295
    %v1297 = vpop.f32.mrb[0].mxu0
    %1298 = vmatprep.mubr.bf16.mxu0 %v1023
    %1299 = vmatmul.mubr.bf16.gmra.mrb[0].mxu0 %v1022
    %v1300 = vpop.f32.mrb[0].mxu0
    %v1301 = vadd.f32 %v720, %v1300
    %v1302 = vpop.f32.mrb[0].mxu0
    %v1303 = vpop.f32.mrb[0].mxu0
    %v1304 = vadd.f32 %v720, %v1303
    %v1305 = vpop.f32.mrb[0].mxu0
    %1306 = vmatprep.mubr.bf16.mxu0 %v1026
    %1307 = vmatmul.mubr.bf16.gmra.mrb[0].mxu0 %v1025
    %v1308 = vpop.f32.mrb[0].mxu0
    %v1309 = vadd.f32 %v720, %v1308
    %v1310 = vpop.f32.mrb[0].mxu0
    %v1311 = vpop.f32.mrb[0].mxu0
    %v1312 = vadd.f32 %v720, %v1311
    %v1313 = vpop.f32.mrb[0].mxu0
    %1314 = vmatprep.mubr.bf16.mxu0 %v1029
    %1315 = vmatmul.mubr.bf16.gmra.mrb[0].mxu0 %v1028
    %v1316 = vpop.f32.mrb[0].mxu0
    %v1317 = vadd.f32 %v720, %v1316
    %v1318 = vpop.f32.mrb[0].mxu0
    %v1319 = vpop.f32.mrb[0].mxu0
    %v1320 = vadd.f32 %v720, %v1319
    %v1321 = vpop.f32.mrb[0].mxu0
    %1322 = vmatprep.mubr.bf16.mxu0 %v1032
    %1323 = vmatmul.mubr.bf16.gmra.mrb[0].mxu0 %v1031
    %v1324 = vpop.f32.mrb[0].mxu0
    %v1325 = vadd.f32 %v720, %v1324
    %v1326 = vpop.f32.mrb[0].mxu0
    %v1327 = vpop.f32.mrb[0].mxu0
    %v1328 = vadd.f32 %v720, %v1327
    %v1329 = vpop.f32.mrb[0].mxu0
    %1330 = vdwg.mxu0
    %1331 = vmatprep.subr.bf16.mxu0 0
    %1332 = vmatpush1.bf16.msra.mxu0 %v707
    %1333 = vmatprep.subr.bf16.mxu0 0
    %1334 = vmatpush1.bf16.msra.mxu0 %v708
    %1335 = vmatprep.subr.bf16.mxu0 0
    %1336 = vmatpush1.bf16.msra.mxu0 %v709
    %1337 = vmatprep.subr.bf16.mxu0 0
    %1338 = vmatpush1.bf16.msra.mxu0 %v710
    %1339 = vmatprep.subr.bf16.mxu0 0
    %1340 = vmatpush1.bf16.msra.mxu0 %v711
    %1341 = vmatprep.subr.bf16.mxu0 0
    %1342 = vmatpush1.bf16.msra.mxu0 %v712
    %1343 = vmatprep.subr.bf16.mxu0 0
    %1344 = vmatpush1.bf16.msra.mxu0 %v713
    %1345 = vmatprep.subr.bf16.mxu0 0
    %1346 = vmatpush1.bf16.msra.mxu0 %v714
    %1347 = vmatprep.subr.bf16.mxu0 0
    %1348 = vmatpush1.bf16.msra.mxu0 0
    %1349 = vmatprep.subr.bf16.mxu0 0
    %1350 = vmatpush1.bf16.msra.mxu0 0
    %1351 = vmatprep.subr.bf16.mxu0 0
    %1352 = vmatpush1.bf16.msra.mxu0 0
    %1353 = vmatprep.subr.bf16.mxu0 0
    %1354 = vmatpush1.bf16.msra.mxu0 0
    %1355 = vmatprep.subr.bf16.mxu0 0
    %1356 = vmatpush1.bf16.msra.mxu0 0
    %1357 = vmatprep.subr.bf16.mxu0 0
    %1358 = vmatpush1.bf16.msra.mxu0 0
    %1359 = vmatprep.subr.bf16.mxu0 0
    %1360 = vmatpush1.bf16.msra.mxu0 0
    %1361 = vmatprep.subr.bf16.mxu0 0
    %1362 = vmatpush1.bf16.msra.mxu0 0
    %1363 = vmatprep.mubr.bf16.mxu0 0
    %1364 = vmatmul.mubr.bf16.gmra.mrb[0].mxu0 %v964
    %v1365 = vpop.f32.mrb[0].mxu0
    %v1366 = vadd.f32 %v1141, %v1365
    %v1367 = vpop.f32.mrb[0].mxu0
    %v1368 = vpop.f32.mrb[0].mxu0
    %v1369 = vadd.f32 %v1144, %v1368
    %v1370 = vpop.f32.mrb[0].mxu0
    %1371 = vmatprep.mubr.bf16.mxu0 0
    %1372 = vmatmul.mubr.bf16.gmra.mrb[0].mxu0 %v967
    %v1373 = vpop.f32.mrb[0].mxu0
    %v1374 = vadd.f32 %v1149, %v1373
    %v1375 = vpop.f32.mrb[0].mxu0
    %v1376 = vpop.f32.mrb[0].mxu0
    %v1377 = vadd.f32 %v1152, %v1376
    %v1378 = vpop.f32.mrb[0].mxu0
    %1379 = vmatprep.mubr.bf16.mxu0 0
    %1380 = vmatmul.mubr.bf16.gmra.mrb[0].mxu0 %v970
    %v1381 = vpop.f32.mrb[0].mxu0
    %v1382 = vadd.f32 %v1157, %v1381
    %v1383 = vpop.f32.mrb[0].mxu0
    %v1384 = vpop.f32.mrb[0].mxu0
    %v1385 = vadd.f32 %v1160, %v1384
    %v1386 = vpop.f32.mrb[0].mxu0
    %1387 = vmatprep.mubr.bf16.mxu0 0
    %1388 = vmatmul.mubr.bf16.gmra.mrb[0].mxu0 %v973
    %v1389 = vpop.f32.mrb[0].mxu0
    %v1390 = vadd.f32 %v1165, %v1389
    %v1391 = vpop.f32.mrb[0].mxu0
    %v1392 = vpop.f32.mrb[0].mxu0
    %v1393 = vadd.f32 %v1168, %v1392
    %v1394 = vpop.f32.mrb[0].mxu0
    %1395 = vmatprep.mubr.bf16.mxu0 0
    %1396 = vmatmul.mubr.bf16.gmra.mrb[0].mxu0 %v976
    %v1397 = vpop.f32.mrb[0].mxu0
    %v1398 = vadd.f32 %v1173, %v1397
    %v1399 = vpop.f32.mrb[0].mxu0
    %v1400 = vpop.f32.mrb[0].mxu0
    %v1401 = vadd.f32 %v1176, %v1400
    %v1402 = vpop.f32.mrb[0].mxu0
    %1403 = vmatprep.mubr.bf16.mxu0 0
    %1404 = vmatmul.mubr.bf16.gmra.mrb[0].mxu0 %v979
    %v1405 = vpop.f32.mrb[0].mxu0
    %v1406 = vadd.f32 %v1181, %v1405
    %v1407 = vpop.f32.mrb[0].mxu0
    %v1408 = vpop.f32.mrb[0].mxu0
    %v1409 = vadd.f32 %v1184, %v1408
    %v1410 = vpop.f32.mrb[0].mxu0
    %1411 = vmatprep.mubr.bf16.mxu0 0
    %1412 = vmatmul.mubr.bf16.gmra.mrb[0].mxu0 %v982
    %v1413 = vpop.f32.mrb[0].mxu0
    %v1414 = vadd.f32 %v1189, %v1413
    %v1415 = vpop.f32.mrb[0].mxu0
    %v1416 = vpop.f32.mrb[0].mxu0
    %v1417 = vadd.f32 %v1192, %v1416
    %v1418 = vpop.f32.mrb[0].mxu0
    %1419 = vmatprep.mubr.bf16.mxu0 0
    %1420 = vmatmul.mubr.bf16.gmra.mrb[0].mxu0 %v985
    %v1421 = vpop.f32.mrb[0].mxu0
    %v1422 = vadd.f32 %v1197, %v1421
    %v1423 = vpop.f32.mrb[0].mxu0
    %v1424 = vpop.f32.mrb[0].mxu0
    %v1425 = vadd.f32 %v1200, %v1424
    %v1426 = vpop.f32.mrb[0].mxu0
    %1427 = vmatprep.mubr.bf16.mxu0 0
    %1428 = vmatmul.mubr.bf16.gmra.mrb[0].mxu0 %v988
    %v1429 = vpop.f32.mrb[0].mxu0
    %v1430 = vadd.f32 %v1205, %v1429
    %v1431 = vpop.f32.mrb[0].mxu0
    %v1432 = vpop.f32.mrb[0].mxu0
    %v1433 = vadd.f32 %v1208, %v1432
    %v1434 = vpop.f32.mrb[0].mxu0
    %1435 = vmatprep.mubr.bf16.mxu0 0
    %1436 = vmatmul.mubr.bf16.gmra.mrb[0].mxu0 %v991
    %v1437 = vpop.f32.mrb[0].mxu0
    %v1438 = vadd.f32 %v1213, %v1437
    %v1439 = vpop.f32.mrb[0].mxu0
    %v1440 = vpop.f32.mrb[0].mxu0
    %v1441 = vadd.f32 %v1216, %v1440
    %v1442 = vpop.f32.mrb[0].mxu0
    %1443 = vmatprep.mubr.bf16.mxu0 0
    %1444 = vmatmul.mubr.bf16.gmra.mrb[0].mxu0 %v994
    %v1445 = vpop.f32.mrb[0].mxu0
    %v1446 = vadd.f32 %v1221, %v1445
    %v1447 = vpop.f32.mrb[0].mxu0
    %v1448 = vpop.f32.mrb[0].mxu0
    %v1449 = vadd.f32 %v1224, %v1448
    %v1450 = vpop.f32.mrb[0].mxu0
    %1451 = vmatprep.mubr.bf16.mxu0 0
    %1452 = vmatmul.mubr.bf16.gmra.mrb[0].mxu0 %v997
    %v1453 = vpop.f32.mrb[0].mxu0
    %v1454 = vadd.f32 %v1229, %v1453
    %v1455 = vpop.f32.mrb[0].mxu0
    %v1456 = vpop.f32.mrb[0].mxu0
    %v1457 = vadd.f32 %v1232, %v1456
    %v1458 = vpop.f32.mrb[0].mxu0
    %1459 = vmatprep.mubr.bf16.mxu0 0
    %1460 = vmatmul.mubr.bf16.gmra.mrb[0].mxu0 %v1000
    %v1461 = vpop.f32.mrb[0].mxu0
    %v1462 = vadd.f32 %v1237, %v1461
    %v1463 = vpop.f32.mrb[0].mxu0
    %v1464 = vpop.f32.mrb[0].mxu0
    %v1465 = vadd.f32 %v1240, %v1464
    %v1466 = vpop.f32.mrb[0].mxu0
    %1467 = vmatprep.mubr.bf16.mxu0 0
    %1468 = vmatmul.mubr.bf16.gmra.mrb[0].mxu0 %v1003
    %v1469 = vpop.f32.mrb[0].mxu0
    %v1470 = vadd.f32 %v1245, %v1469
    %v1471 = vpop.f32.mrb[0].mxu0
    %v1472 = vpop.f32.mrb[0].mxu0
    %v1473 = vadd.f32 %v1248, %v1472
    %v1474 = vpop.f32.mrb[0].mxu0
    %1475 = vmatprep.mubr.bf16.mxu0 0
    %1476 = vmatmul.mubr.bf16.gmra.mrb[0].mxu0 %v1006
    %v1477 = vpop.f32.mrb[0].mxu0
    %v1478 = vadd.f32 %v1253, %v1477
    %v1479 = vpop.f32.mrb[0].mxu0
    %v1480 = vpop.f32.mrb[0].mxu0
    %v1481 = vadd.f32 %v1256, %v1480
    %v1482 = vpop.f32.mrb[0].mxu0
    %1483 = vmatprep.mubr.bf16.mxu0 0
    %1484 = vmatmul.mubr.bf16.gmra.mrb[0].mxu0 %v1009
    %v1485 = vpop.f32.mrb[0].mxu0
    %v1486 = vadd.f32 %v1261, %v1485
    %v1487 = vpop.f32.mrb[0].mxu0
    %v1488 = vpop.f32.mrb[0].mxu0
    %v1489 = vadd.f32 %v1264, %v1488
    %v1490 = vpop.f32.mrb[0].mxu0
    %1491 = vmatprep.mubr.bf16.mxu0 0
    %1492 = vmatmul.mubr.bf16.gmra.mrb[0].mxu0 %v1012
    %v1493 = vpop.f32.mrb[0].mxu0
    %v1494 = vadd.f32 %v1269, %v1493
    %v1495 = vpop.f32.mrb[0].mxu0
    %v1496 = vpop.f32.mrb[0].mxu0
    %v1497 = vadd.f32 %v1272, %v1496
    %v1498 = vpop.f32.mrb[0].mxu0
    %1499 = vmatprep.mubr.bf16.mxu0 0
    %1500 = vmatmul.mubr.bf16.gmra.mrb[0].mxu0 %v1015
    %v1501 = vpop.f32.mrb[0].mxu0
    %v1502 = vadd.f32 %v1277, %v1501
    %v1503 = vpop.f32.mrb[0].mxu0
    %v1504 = vpop.f32.mrb[0].mxu0
    %v1505 = vadd.f32 %v1280, %v1504
    %v1506 = vpop.f32.mrb[0].mxu0
    %1507 = vmatprep.mubr.bf16.mxu0 0
    %1508 = vmatmul.mubr.bf16.gmra.mrb[0].mxu0 %v1018
    %v1509 = vpop.f32.mrb[0].mxu0
    %v1510 = vadd.f32 %v1285, %v1509
    %v1511 = vpop.f32.mrb[0].mxu0
    %v1512 = vpop.f32.mrb[0].mxu0
    %v1513 = vadd.f32 %v1288, %v1512
    %v1514 = vpop.f32.mrb[0].mxu0
    %1515 = vmatprep.mubr.bf16.mxu0 0
    %1516 = vmatmul.mubr.bf16.gmra.mrb[0].mxu0 %v1021
    %v1517 = vpop.f32.mrb[0].mxu0
    %v1518 = vadd.f32 %v1293, %v1517
    %v1519 = vpop.f32.mrb[0].mxu0
    %v1520 = vpop.f32.mrb[0].mxu0
    %v1521 = vadd.f32 %v1296, %v1520
    %v1522 = vpop.f32.mrb[0].mxu0
    %1523 = vmatprep.mubr.bf16.mxu0 0
    %1524 = vmatmul.mubr.bf16.gmra.mrb[0].mxu0 %v1024
    %v1525 = vpop.f32.mrb[0].mxu0
    %v1526 = vadd.f32 %v1301, %v1525
    %v1527 = vpop.f32.mrb[0].mxu0
    %v1528 = vpop.f32.mrb[0].mxu0
    %v1529 = vadd.f32 %v1304, %v1528
    %v1530 = vpop.f32.mrb[0].mxu0
    %1531 = vmatprep.mubr.bf16.mxu0 0
    %1532 = vmatmul.mubr.bf16.gmra.mrb[0].mxu0 %v1027
    %v1533 = vpop.f32.mrb[0].mxu0
    %v1534 = vadd.f32 %v1309, %v1533
    %v1535 = vpop.f32.mrb[0].mxu0
    %v1536 = vpop.f32.mrb[0].mxu0
    %v1537 = vadd.f32 %v1312, %v1536
    %v1538 = vpop.f32.mrb[0].mxu0
    %1539 = vmatprep.mubr.bf16.mxu0 0
    %1540 = vmatmul.mubr.bf16.gmra.mrb[0].mxu0 %v1030
    %v1541 = vpop.f32.mrb[0].mxu0
    %v1542 = vadd.f32 %v1317, %v1541
    %v1543 = vpop.f32.mrb[0].mxu0
    %v1544 = vpop.f32.mrb[0].mxu0
    %v1545 = vadd.f32 %v1320, %v1544
    %v1546 = vpop.f32.mrb[0].mxu0
    %1547 = vmatprep.mubr.bf16.mxu0 0
    %1548 = vmatmul.mubr.bf16.gmra.mrb[0].mxu0 %v1033
    %v1549 = vpop.f32.mrb[0].mxu0
    %v1550 = vadd.f32 %v1325, %v1549
    %v1551 = vpop.f32.mrb[0].mxu0
    %v1552 = vpop.f32.mrb[0].mxu0
    %v1553 = vadd.f32 %v1328, %v1552
    %v1554 = vpop.f32.mrb[0].mxu0
    %1555 = vdwg.mxu0
    %v1556 = vmax.f32 %v1366, 0.0
    %v1557 = vmax.f32 %v1369, 0.0
    %v1558 = vmax.f32 %v1374, 0.0
    %v1559 = vmax.f32 %v1377, 0.0
    %v1560 = vmax.f32 %v1382, 0.0
    %v1561 = vmax.f32 %v1385, 0.0
    %v1562 = vmax.f32 %v1390, 0.0
    %v1563 = vmax.f32 %v1393, 0.0
    %v1564 = vmax.f32 %v1398, 0.0
    %v1565 = vmax.f32 %v1401, 0.0
    %v1566 = vmax.f32 %v1406, 0.0
    %v1567 = vmax.f32 %v1409, 0.0
    %v1568 = vmax.f32 %v1414, 0.0
    %v1569 = vmax.f32 %v1417, 0.0
    %v1570 = vmax.f32 %v1422, 0.0
    %v1571 = vmax.f32 %v1425, 0.0
    %v1572 = vmax.f32 %v1430, 0.0
    %v1573 = vmax.f32 %v1433, 0.0
    %v1574 = vmax.f32 %v1438, 0.0
    %v1575 = vmax.f32 %v1441, 0.0
    %v1576 = vmax.f32 %v1446, 0.0
    %v1577 = vmax.f32 %v1449, 0.0
    %v1578 = vmax.f32 %v1454, 0.0
    %v1579 = vmax.f32 %v1457, 0.0
    %v1580 = vmax.f32 %v1462, 0.0
    %v1581 = vmax.f32 %v1465, 0.0
    %v1582 = vmax.f32 %v1470, 0.0
    %v1583 = vmax.f32 %v1473, 0.0
    %v1584 = vmax.f32 %v1478, 0.0
    %v1585 = vmax.f32 %v1481, 0.0
    %v1586 = vmax.f32 %v1486, 0.0
    %v1587 = vmax.f32 %v1489, 0.0
    %v1588 = vmax.f32 %v1494, 0.0
    %v1589 = vmax.f32 %v1497, 0.0
    %v1590 = vmax.f32 %v1502, 0.0
    %v1591 = vmax.f32 %v1505, 0.0
    %v1592 = vmax.f32 %v1510, 0.0
    %v1593 = vmax.f32 %v1513, 0.0
    %v1594 = vmax.f32 %v1518, 0.0
    %v1595 = vmax.f32 %v1521, 0.0
    %v1596 = vmax.f32 %v1526, 0.0
    %v1597 = vmax.f32 %v1529, 0.0
    %v1598 = vmax.f32 %v1534, 0.0
    %v1599 = vmax.f32 %v1537, 0.0
    %v1600 = vmax.f32 %v1542, 0.0
    %v1601 = vmax.f32 %v1545, 0.0
    %v1602 = vmax.f32 %v1550, 0.0
    %v1603 = vmax.f32 %v1553, 0.0
    %v1604 = vpack.c.bf16 %v1557, %v1556
    %v1605 = vpack.c.bf16 %v1559, %v1558
    %v1606 = vpack.c.bf16 %v1561, %v1560
    %v1607 = vpack.c.bf16 %v1563, %v1562
    %v1608 = vpack.c.bf16 %v1565, %v1564
    %v1609 = vpack.c.bf16 %v1567, %v1566
    %v1610 = vpack.c.bf16 %v1569, %v1568
    %v1611 = vpack.c.bf16 %v1571, %v1570
    %v1612 = vpack.c.bf16 %v1573, %v1572
    %v1613 = vpack.c.bf16 %v1575, %v1574
    %v1614 = vpack.c.bf16 %v1577, %v1576
    %v1615 = vpack.c.bf16 %v1579, %v1578
    %v1616 = vpack.c.bf16 %v1581, %v1580
    %v1617 = vpack.c.bf16 %v1583, %v1582
    %v1618 = vpack.c.bf16 %v1585, %v1584
    %v1619 = vpack.c.bf16 %v1587, %v1586
    %v1620 = vpack.c.bf16 %v1589, %v1588
    %v1621 = vpack.c.bf16 %v1591, %v1590
    %v1622 = vpack.c.bf16 %v1593, %v1592
    %v1623 = vpack.c.bf16 %v1595, %v1594
    %v1624 = vpack.c.bf16 %v1597, %v1596
    %v1625 = vpack.c.bf16 %v1599, %v1598
    %v1626 = vpack.c.bf16 %v1601, %v1600
    %v1627 = vpack.c.bf16 %v1603, %v1602
    %v1628 = vld [vmem:[#allocation10] sm:$0xf]
    %v1629 = vld [vmem:[#allocation10 + $0x4] sm:$0xf]
    %v1630 = vld [vmem:[#allocation10 + $0x8] sm:$0xf]
    %v1631 = vld [vmem:[#allocation10 + $0xc] sm:$0xf]
    %v1632 = vld [vmem:[#allocation10 + $0x10] sm:$0xf]
    %v1633 = vld [vmem:[#allocation10 + $0x14] sm:$0xf]
    %v1634 = vld [vmem:[#allocation10 + $0x18] sm:$0xf]
    %v1635 = vld [vmem:[#allocation10 + $0x1c] sm:$0xf]
    %v1636 = vld [vmem:[#allocation10 + $0x20] sm:$0xf]
    %v1637 = vld [vmem:[#allocation10 + $0x24] sm:$0xf]
    %v1638 = vld [vmem:[#allocation10 + $0x28] sm:$0xf]
    %v1639 = vld [vmem:[#allocation10 + $0x2c] sm:$0xf]
    %v1640 = vld [vmem:[#allocation10 + $0x30] sm:$0xf]
    %v1641 = vld [vmem:[#allocation10 + $0x34] sm:$0xf]
    %v1642 = vld [vmem:[#allocation10 + $0x38] sm:$0xf]
    %v1643 = vld [vmem:[#allocation10 + $0x3c] sm:$0xf]
    %v1660 = vunpack.c.l.b16 %v1628
    %v1661 = vunpack.c.l.b16 %v1629
    %v1662 = vunpack.c.l.b16 %v1630
    %v1663 = vunpack.c.l.b16 %v1631
    %v1664 = vunpack.c.l.b16 %v1632
    %v1665 = vunpack.c.l.b16 %v1633
    %v1666 = vunpack.c.l.b16 %v1634
    %v1667 = vunpack.c.l.b16 %v1635
    %v1668 = vunpack.c.l.b16 %v1636
    %v1669 = vunpack.c.l.b16 %v1637
    %v1670 = vunpack.c.l.b16 %v1638
    %v1671 = vunpack.c.l.b16 %v1639
    %v1672 = vunpack.c.l.b16 %v1640
    %v1673 = vunpack.c.l.b16 %v1641
    %v1674 = vunpack.c.l.b16 %v1642
    %v1675 = vunpack.c.l.b16 %v1643
    %v1676 = vpack.c.b16 %v1661, %v1660
    %v1677 = vpack.c.b16 %v1663, %v1662
    %v1678 = vpack.c.b16 %v1665, %v1664
    %v1679 = vpack.c.b16 %v1667, %v1666
    %v1680 = vpack.c.b16 %v1669, %v1668
    %v1681 = vpack.c.b16 %v1671, %v1670
    %v1682 = vpack.c.b16 %v1673, %v1672
    %v1683 = vpack.c.b16 %v1675, %v1674
    %1692 = vmatprep.subr.bf16.mxu0 0
    %1693 = vmatpush1.bf16.msra.mxu0 %v1676
    %1694 = vmatprep.subr.bf16.mxu0 0
    %1695 = vmatpush1.bf16.msra.mxu0 %v1677
    %1696 = vmatprep.subr.bf16.mxu0 0
    %1697 = vmatpush1.bf16.msra.mxu0 %v1678
    %1698 = vmatprep.subr.bf16.mxu0 0
    %1699 = vmatpush1.bf16.msra.mxu0 %v1679
    %1700 = vmatprep.subr.bf16.mxu0 0
    %1701 = vmatpush1.bf16.msra.mxu0 %v1680
    %1702 = vmatprep.subr.bf16.mxu0 0
    %1703 = vmatpush1.bf16.msra.mxu0 %v1681
    %1704 = vmatprep.subr.bf16.mxu0 0
    %1705 = vmatpush1.bf16.msra.mxu0 %v1682
    %1706 = vmatprep.subr.bf16.mxu0 0
    %1707 = vmatpush1.bf16.msra.mxu0 %v1683
    %1708 = vmatprep.subr.bf16.mxu0 0
    %1709 = vmatpush1.bf16.msra.mxu0 0
    %1710 = vmatprep.subr.bf16.mxu0 0
    %1711 = vmatpush1.bf16.msra.mxu0 0
    %1712 = vmatprep.subr.bf16.mxu0 0
    %1713 = vmatpush1.bf16.msra.mxu0 0
    %1714 = vmatprep.subr.bf16.mxu0 0
    %1715 = vmatpush1.bf16.msra.mxu0 0
    %1716 = vmatprep.subr.bf16.mxu0 0
    %1717 = vmatpush1.bf16.msra.mxu0 0
    %1718 = vmatprep.subr.bf16.mxu0 0
    %1719 = vmatpush1.bf16.msra.mxu0 0
    %1720 = vmatprep.subr.bf16.mxu0 0
    %1721 = vmatpush1.bf16.msra.mxu0 0
    %1722 = vmatprep.subr.bf16.mxu0 0
    %1723 = vmatpush1.bf16.msra.mxu0 0
    %1724 = vmatprep.mubr.bf16.mxu0 0
    %1725 = vmatmul.mubr.bf16.gmra.mrb[0].mxu0 %v1604
    %v1726 = vpop.f32.mrb[0].mxu0
    %v1727 = vadd.f32 0.0, %v1726
    %v1728 = vpop.f32.mrb[0].mxu0
    %v1729 = vpop.f32.mrb[0].mxu0
    %v1730 = vadd.f32 0.0, %v1729
    %v1731 = vpop.f32.mrb[0].mxu0
    %1732 = vmatprep.mubr.bf16.mxu0 0
    %1733 = vmatmul.mubr.bf16.gmra.mrb[0].mxu0 %v1605
    %v1734 = vpop.f32.mrb[0].mxu0
    %v1735 = vadd.f32 0.0, %v1734
    %v1736 = vpop.f32.mrb[0].mxu0
    %v1737 = vpop.f32.mrb[0].mxu0
    %v1738 = vadd.f32 0.0, %v1737
    %v1739 = vpop.f32.mrb[0].mxu0
    %1740 = vmatprep.mubr.bf16.mxu0 0
    %1741 = vmatmul.mubr.bf16.gmra.mrb[0].mxu0 %v1606
    %v1742 = vpop.f32.mrb[0].mxu0
    %v1743 = vadd.f32 0.0, %v1742
    %v1744 = vpop.f32.mrb[0].mxu0
    %v1745 = vpop.f32.mrb[0].mxu0
    %v1746 = vadd.f32 0.0, %v1745
    %v1747 = vpop.f32.mrb[0].mxu0
    %1748 = vmatprep.mubr.bf16.mxu0 0
    %1749 = vmatmul.mubr.bf16.gmra.mrb[0].mxu0 %v1607
    %v1750 = vpop.f32.mrb[0].mxu0
    %v1751 = vadd.f32 0.0, %v1750
    %v1752 = vpop.f32.mrb[0].mxu0
    %v1753 = vpop.f32.mrb[0].mxu0
    %v1754 = vadd.f32 0.0, %v1753
    %v1755 = vpop.f32.mrb[0].mxu0
    %1756 = vmatprep.mubr.bf16.mxu0 0
    %1757 = vmatmul.mubr.bf16.gmra.mrb[0].mxu0 %v1608
    %v1758 = vpop.f32.mrb[0].mxu0
    %v1759 = vadd.f32 0.0, %v1758
    %v1760 = vpop.f32.mrb[0].mxu0
    %v1761 = vpop.f32.mrb[0].mxu0
    %v1762 = vadd.f32 0.0, %v1761
    %v1763 = vpop.f32.mrb[0].mxu0
    %1764 = vmatprep.mubr.bf16.mxu0 0
    %1765 = vmatmul.mubr.bf16.gmra.mrb[0].mxu0 %v1609
    %v1766 = vpop.f32.mrb[0].mxu0
    %v1767 = vadd.f32 0.0, %v1766
    %v1768 = vpop.f32.mrb[0].mxu0
    %v1769 = vpop.f32.mrb[0].mxu0
    %v1770 = vadd.f32 0.0, %v1769
    %v1771 = vpop.f32.mrb[0].mxu0
    %1772 = vmatprep.mubr.bf16.mxu0 0
    %1773 = vmatmul.mubr.bf16.gmra.mrb[0].mxu0 %v1610
    %v1774 = vpop.f32.mrb[0].mxu0
    %v1775 = vadd.f32 0.0, %v1774
    %v1776 = vpop.f32.mrb[0].mxu0
    %v1777 = vpop.f32.mrb[0].mxu0
    %v1778 = vadd.f32 0.0, %v1777
    %v1779 = vpop.f32.mrb[0].mxu0
    %1780 = vmatprep.mubr.bf16.mxu0 0
    %1781 = vmatmul.mubr.bf16.gmra.mrb[0].mxu0 %v1611
    %v1782 = vpop.f32.mrb[0].mxu0
    %v1783 = vadd.f32 0.0, %v1782
    %v1784 = vpop.f32.mrb[0].mxu0
    %v1785 = vpop.f32.mrb[0].mxu0
    %v1786 = vadd.f32 0.0, %v1785
    %v1787 = vpop.f32.mrb[0].mxu0
    %1788 = vmatprep.mubr.bf16.mxu0 0
    %1789 = vmatmul.mubr.bf16.gmra.mrb[0].mxu0 %v1612
    %v1790 = vpop.f32.mrb[0].mxu0
    %v1791 = vadd.f32 0.0, %v1790
    %v1792 = vpop.f32.mrb[0].mxu0
    %v1793 = vpop.f32.mrb[0].mxu0
    %v1794 = vadd.f32 0.0, %v1793
    %v1795 = vpop.f32.mrb[0].mxu0
    %1796 = vmatprep.mubr.bf16.mxu0 0
    %1797 = vmatmul.mubr.bf16.gmra.mrb[0].mxu0 %v1613
    %v1798 = vpop.f32.mrb[0].mxu0
    %v1799 = vadd.f32 0.0, %v1798
    %v1800 = vpop.f32.mrb[0].mxu0
    %v1801 = vpop.f32.mrb[0].mxu0
    %v1802 = vadd.f32 0.0, %v1801
    %v1803 = vpop.f32.mrb[0].mxu0
    %1804 = vmatprep.mubr.bf16.mxu0 0
    %1805 = vmatmul.mubr.bf16.gmra.mrb[0].mxu0 %v1614
    %v1806 = vpop.f32.mrb[0].mxu0
    %v1807 = vadd.f32 0.0, %v1806
    %v1808 = vpop.f32.mrb[0].mxu0
    %v1809 = vpop.f32.mrb[0].mxu0
    %v1810 = vadd.f32 0.0, %v1809
    %v1811 = vpop.f32.mrb[0].mxu0
    %1812 = vmatprep.mubr.bf16.mxu0 0
    %1813 = vmatmul.mubr.bf16.gmra.mrb[0].mxu0 %v1615
    %v1814 = vpop.f32.mrb[0].mxu0
    %v1815 = vadd.f32 0.0, %v1814
    %v1816 = vpop.f32.mrb[0].mxu0
    %v1817 = vpop.f32.mrb[0].mxu0
    %v1818 = vadd.f32 0.0, %v1817
    %v1819 = vpop.f32.mrb[0].mxu0
    %1820 = vmatprep.mubr.bf16.mxu0 0
    %1821 = vmatmul.mubr.bf16.gmra.mrb[0].mxu0 %v1616
    %v1822 = vpop.f32.mrb[0].mxu0
    %v1823 = vadd.f32 0.0, %v1822
    %v1824 = vpop.f32.mrb[0].mxu0
    %v1825 = vpop.f32.mrb[0].mxu0
    %v1826 = vadd.f32 0.0, %v1825
    %v1827 = vpop.f32.mrb[0].mxu0
    %1828 = vmatprep.mubr.bf16.mxu0 0
    %1829 = vmatmul.mubr.bf16.gmra.mrb[0].mxu0 %v1617
    %v1830 = vpop.f32.mrb[0].mxu0
    %v1831 = vadd.f32 0.0, %v1830
    %v1832 = vpop.f32.mrb[0].mxu0
    %v1833 = vpop.f32.mrb[0].mxu0
    %v1834 = vadd.f32 0.0, %v1833
    %v1835 = vpop.f32.mrb[0].mxu0
    %1836 = vmatprep.mubr.bf16.mxu0 0
    %1837 = vmatmul.mubr.bf16.gmra.mrb[0].mxu0 %v1618
    %v1838 = vpop.f32.mrb[0].mxu0
    %v1839 = vadd.f32 0.0, %v1838
    %v1840 = vpop.f32.mrb[0].mxu0
    %v1841 = vpop.f32.mrb[0].mxu0
    %v1842 = vadd.f32 0.0, %v1841
    %v1843 = vpop.f32.mrb[0].mxu0
    %1844 = vmatprep.mubr.bf16.mxu0 0
    %1845 = vmatmul.mubr.bf16.gmra.mrb[0].mxu0 %v1619
    %v1846 = vpop.f32.mrb[0].mxu0
    %v1847 = vadd.f32 0.0, %v1846
    %v1848 = vpop.f32.mrb[0].mxu0
    %v1849 = vpop.f32.mrb[0].mxu0
    %v1850 = vadd.f32 0.0, %v1849
    %v1851 = vpop.f32.mrb[0].mxu0
    %1852 = vmatprep.mubr.bf16.mxu0 0
    %1853 = vmatmul.mubr.bf16.gmra.mrb[0].mxu0 %v1620
    %v1854 = vpop.f32.mrb[0].mxu0
    %v1855 = vadd.f32 0.0, %v1854
    %v1856 = vpop.f32.mrb[0].mxu0
    %v1857 = vpop.f32.mrb[0].mxu0
    %v1858 = vadd.f32 0.0, %v1857
    %v1859 = vpop.f32.mrb[0].mxu0
    %1860 = vmatprep.mubr.bf16.mxu0 0
    %1861 = vmatmul.mubr.bf16.gmra.mrb[0].mxu0 %v1621
    %v1862 = vpop.f32.mrb[0].mxu0
    %v1863 = vadd.f32 0.0, %v1862
    %v1864 = vpop.f32.mrb[0].mxu0
    %v1865 = vpop.f32.mrb[0].mxu0
    %v1866 = vadd.f32 0.0, %v1865
    %v1867 = vpop.f32.mrb[0].mxu0
    %1868 = vmatprep.mubr.bf16.mxu0 0
    %1869 = vmatmul.mubr.bf16.gmra.mrb[0].mxu0 %v1622
    %v1870 = vpop.f32.mrb[0].mxu0
    %v1871 = vadd.f32 0.0, %v1870
    %v1872 = vpop.f32.mrb[0].mxu0
    %v1873 = vpop.f32.mrb[0].mxu0
    %v1874 = vadd.f32 0.0, %v1873
    %v1875 = vpop.f32.mrb[0].mxu0
    %1876 = vmatprep.mubr.bf16.mxu0 0
    %1877 = vmatmul.mubr.bf16.gmra.mrb[0].mxu0 %v1623
    %v1878 = vpop.f32.mrb[0].mxu0
    %v1879 = vadd.f32 0.0, %v1878
    %v1880 = vpop.f32.mrb[0].mxu0
    %v1881 = vpop.f32.mrb[0].mxu0
    %v1882 = vadd.f32 0.0, %v1881
    %v1883 = vpop.f32.mrb[0].mxu0
    %1884 = vmatprep.mubr.bf16.mxu0 0
    %1885 = vmatmul.mubr.bf16.gmra.mrb[0].mxu0 %v1624
    %v1886 = vpop.f32.mrb[0].mxu0
    %v1887 = vadd.f32 0.0, %v1886
    %v1888 = vpop.f32.mrb[0].mxu0
    %v1889 = vpop.f32.mrb[0].mxu0
    %v1890 = vadd.f32 0.0, %v1889
    %v1891 = vpop.f32.mrb[0].mxu0
    %1892 = vmatprep.mubr.bf16.mxu0 0
    %1893 = vmatmul.mubr.bf16.gmra.mrb[0].mxu0 %v1625
    %v1894 = vpop.f32.mrb[0].mxu0
    %v1895 = vadd.f32 0.0, %v1894
    %v1896 = vpop.f32.mrb[0].mxu0
    %v1897 = vpop.f32.mrb[0].mxu0
    %v1898 = vadd.f32 0.0, %v1897
    %v1899 = vpop.f32.mrb[0].mxu0
    %1900 = vmatprep.mubr.bf16.mxu0 0
    %1901 = vmatmul.mubr.bf16.gmra.mrb[0].mxu0 %v1626
    %v1902 = vpop.f32.mrb[0].mxu0
    %v1903 = vadd.f32 0.0, %v1902
    %v1904 = vpop.f32.mrb[0].mxu0
    %v1905 = vpop.f32.mrb[0].mxu0
    %v1906 = vadd.f32 0.0, %v1905
    %v1907 = vpop.f32.mrb[0].mxu0
    %1908 = vmatprep.mubr.bf16.mxu0 0
    %1909 = vmatmul.mubr.bf16.gmra.mrb[0].mxu0 %v1627
    %v1910 = vpop.f32.mrb[0].mxu0
    %v1911 = vadd.f32 0.0, %v1910
    %v1912 = vpop.f32.mrb[0].mxu0
    %v1913 = vpop.f32.mrb[0].mxu0
    %v1914 = vadd.f32 0.0, %v1913
    %v1915 = vpop.f32.mrb[0].mxu0
    %1916 = vdwg.mxu0
    %v1917 = vpack.c.bf16 %v1730, %v1727
    %v1918 = vpack.c.bf16 %v1738, %v1735
    %v1919 = vpack.c.bf16 %v1746, %v1743
    %v1920 = vpack.c.bf16 %v1754, %v1751
    %v1921 = vpack.c.bf16 %v1762, %v1759
    %v1922 = vpack.c.bf16 %v1770, %v1767
    %v1923 = vpack.c.bf16 %v1778, %v1775
    %v1924 = vpack.c.bf16 %v1786, %v1783
    %v1925 = vpack.c.bf16 %v1794, %v1791
    %v1926 = vpack.c.bf16 %v1802, %v1799
    %v1927 = vpack.c.bf16 %v1810, %v1807
    %v1928 = vpack.c.bf16 %v1818, %v1815
    %v1929 = vpack.c.bf16 %v1826, %v1823
    %v1930 = vpack.c.bf16 %v1834, %v1831
    %v1931 = vpack.c.bf16 %v1842, %v1839
    %v1932 = vpack.c.bf16 %v1850, %v1847
    %v1933 = vpack.c.bf16 %v1858, %v1855
    %v1934 = vpack.c.bf16 %v1866, %v1863
    %v1935 = vpack.c.bf16 %v1874, %v1871
    %v1936 = vpack.c.bf16 %v1882, %v1879
    %v1937 = vpack.c.bf16 %v1890, %v1887
    %v1938 = vpack.c.bf16 %v1898, %v1895
    %v1939 = vpack.c.bf16 %v1906, %v1903
    %v1940 = vpack.c.bf16 %v1914, %v1911
    %v1941 = vld [vmem:[%s6] sm:$0x1]
    %v1943 = vlaneseq
    %v1944 = vshrl.u32 %v1943, 7
    %v1945 = vsub.s32 0, %v1944
    %v1946 = vrot.slane %v1941, %v1945
    %1948 = vmatprep.subr.bf16.mxu0 0
    %1949 = vmatpush1.bf16.msra.mxu0 %v1917
    %1950 = vmatprep.subr.bf16.mxu0 0
    %1951 = vmatpush1.bf16.msra.mxu0 %v1918
    %1952 = vmatprep.subr.bf16.mxu0 0
    %1953 = vmatpush1.bf16.msra.mxu0 %v1919
    %1954 = vmatprep.subr.bf16.mxu0 0
    %1955 = vmatpush1.bf16.msra.mxu0 %v1920
    %1956 = vmatprep.subr.bf16.mxu0 0
    %1957 = vmatpush1.bf16.msra.mxu0 %v1921
    %1958 = vmatprep.subr.bf16.mxu0 0
    %1959 = vmatpush1.bf16.msra.mxu0 %v1922
    %1960 = vmatprep.subr.bf16.mxu0 0
    %1961 = vmatpush1.bf16.msra.mxu0 %v1923
    %1962 = vmatprep.subr.bf16.mxu0 0
    %1963 = vmatpush1.bf16.msra.mxu0 %v1924
    %1964 = vmatprep.subr.bf16.mxu0 0
    %1965 = vmatpush1.bf16.msra.mxu0 %v1925
    %1966 = vmatprep.subr.bf16.mxu0 0
    %1967 = vmatpush1.bf16.msra.mxu0 %v1926
    %1968 = vmatprep.subr.bf16.mxu0 0
    %1969 = vmatpush1.bf16.msra.mxu0 %v1927
    %1970 = vmatprep.subr.bf16.mxu0 0
    %1971 = vmatpush1.bf16.msra.mxu0 %v1928
    %1972 = vmatprep.subr.bf16.mxu0 0
    %1973 = vmatpush1.bf16.msra.mxu0 %v1929
    %1974 = vmatprep.subr.bf16.mxu0 0
    %1975 = vmatpush1.bf16.msra.mxu0 %v1930
    %1976 = vmatprep.subr.bf16.mxu0 0
    %1977 = vmatpush1.bf16.msra.mxu0 %v1931
    %1978 = vmatprep.subr.bf16.mxu0 0
    %1979 = vmatpush1.bf16.msra.mxu0 %v1932
    %1980 = vmatprep.mubr.bf16.mxu0 %v963
    %1981 = vmatmul.mubr.bf16.gmra.mrb[0].mxu0 %v962
    %v1982 = vpop.f32.mrb[0].mxu0
    %v1983 = vadd.f32 %v1946, %v1982
    %v1984 = vpop.f32.mrb[0].mxu0
    %v1985 = vpop.f32.mrb[0].mxu0
    %v1986 = vadd.f32 %v1946, %v1985
    %v1987 = vpop.f32.mrb[0].mxu0
    %1988 = vmatprep.mubr.bf16.mxu0 %v966
    %1989 = vmatmul.mubr.bf16.gmra.mrb[0].mxu0 %v965
    %v1990 = vpop.f32.mrb[0].mxu0
    %v1991 = vadd.f32 %v1946, %v1990
    %v1992 = vpop.f32.mrb[0].mxu0
    %v1993 = vpop.f32.mrb[0].mxu0
    %v1994 = vadd.f32 %v1946, %v1993
    %v1995 = vpop.f32.mrb[0].mxu0
    %1996 = vmatprep.mubr.bf16.mxu0 %v969
    %1997 = vmatmul.mubr.bf16.gmra.mrb[0].mxu0 %v968
    %v1998 = vpop.f32.mrb[0].mxu0
    %v1999 = vadd.f32 %v1946, %v1998
    %v2000 = vpop.f32.mrb[0].mxu0
    %v2001 = vpop.f32.mrb[0].mxu0
    %v2002 = vadd.f32 %v1946, %v2001
    %v2003 = vpop.f32.mrb[0].mxu0
    %2004 = vmatprep.mubr.bf16.mxu0 %v972
    %2005 = vmatmul.mubr.bf16.gmra.mrb[0].mxu0 %v971
    %v2006 = vpop.f32.mrb[0].mxu0
    %v2007 = vadd.f32 %v1946, %v2006
    %v2008 = vpop.f32.mrb[0].mxu0
    %v2009 = vpop.f32.mrb[0].mxu0
    %v2010 = vadd.f32 %v1946, %v2009
    %v2011 = vpop.f32.mrb[0].mxu0
    %2012 = vmatprep.mubr.bf16.mxu0 %v975
    %2013 = vmatmul.mubr.bf16.gmra.mrb[0].mxu0 %v974
    %v2014 = vpop.f32.mrb[0].mxu0
    %v2015 = vadd.f32 %v1946, %v2014
    %v2016 = vpop.f32.mrb[0].mxu0
    %v2017 = vpop.f32.mrb[0].mxu0
    %v2018 = vadd.f32 %v1946, %v2017
    %v2019 = vpop.f32.mrb[0].mxu0
    %2020 = vmatprep.mubr.bf16.mxu0 %v978
    %2021 = vmatmul.mubr.bf16.gmra.mrb[0].mxu0 %v977
    %v2022 = vpop.f32.mrb[0].mxu0
    %v2023 = vadd.f32 %v1946, %v2022
    %v2024 = vpop.f32.mrb[0].mxu0
    %v2025 = vpop.f32.mrb[0].mxu0
    %v2026 = vadd.f32 %v1946, %v2025
    %v2027 = vpop.f32.mrb[0].mxu0
    %2028 = vmatprep.mubr.bf16.mxu0 %v981
    %2029 = vmatmul.mubr.bf16.gmra.mrb[0].mxu0 %v980
    %v2030 = vpop.f32.mrb[0].mxu0
    %v2031 = vadd.f32 %v1946, %v2030
    %v2032 = vpop.f32.mrb[0].mxu0
    %v2033 = vpop.f32.mrb[0].mxu0
    %v2034 = vadd.f32 %v1946, %v2033
    %v2035 = vpop.f32.mrb[0].mxu0
    %2036 = vmatprep.mubr.bf16.mxu0 %v984
    %2037 = vmatmul.mubr.bf16.gmra.mrb[0].mxu0 %v983
    %v2038 = vpop.f32.mrb[0].mxu0
    %v2039 = vadd.f32 %v1946, %v2038
    %v2040 = vpop.f32.mrb[0].mxu0
    %v2041 = vpop.f32.mrb[0].mxu0
    %v2042 = vadd.f32 %v1946, %v2041
    %v2043 = vpop.f32.mrb[0].mxu0
    %2044 = vmatprep.mubr.bf16.mxu0 %v987
    %2045 = vmatmul.mubr.bf16.gmra.mrb[0].mxu0 %v986
    %v2046 = vpop.f32.mrb[0].mxu0
    %v2047 = vadd.f32 %v1946, %v2046
    %v2048 = vpop.f32.mrb[0].mxu0
    %v2049 = vpop.f32.mrb[0].mxu0
    %v2050 = vadd.f32 %v1946, %v2049
    %v2051 = vpop.f32.mrb[0].mxu0
    %2052 = vmatprep.mubr.bf16.mxu0 %v990
    %2053 = vmatmul.mubr.bf16.gmra.mrb[0].mxu0 %v989
    %v2054 = vpop.f32.mrb[0].mxu0
    %v2055 = vadd.f32 %v1946, %v2054
    %v2056 = vpop.f32.mrb[0].mxu0
    %v2057 = vpop.f32.mrb[0].mxu0
    %v2058 = vadd.f32 %v1946, %v2057
    %v2059 = vpop.f32.mrb[0].mxu0
    %2060 = vmatprep.mubr.bf16.mxu0 %v993
    %2061 = vmatmul.mubr.bf16.gmra.mrb[0].mxu0 %v992
    %v2062 = vpop.f32.mrb[0].mxu0
    %v2063 = vadd.f32 %v1946, %v2062
    %v2064 = vpop.f32.mrb[0].mxu0
    %v2065 = vpop.f32.mrb[0].mxu0
    %v2066 = vadd.f32 %v1946, %v2065
    %v2067 = vpop.f32.mrb[0].mxu0
    %2068 = vmatprep.mubr.bf16.mxu0 %v996
    %2069 = vmatmul.mubr.bf16.gmra.mrb[0].mxu0 %v995
    %v2070 = vpop.f32.mrb[0].mxu0
    %v2071 = vadd.f32 %v1946, %v2070
    %v2072 = vpop.f32.mrb[0].mxu0
    %v2073 = vpop.f32.mrb[0].mxu0
    %v2074 = vadd.f32 %v1946, %v2073
    %v2075 = vpop.f32.mrb[0].mxu0
    %2076 = vmatprep.mubr.bf16.mxu0 %v999
    %2077 = vmatmul.mubr.bf16.gmra.mrb[0].mxu0 %v998
    %v2078 = vpop.f32.mrb[0].mxu0
    %v2079 = vadd.f32 %v1946, %v2078
    %v2080 = vpop.f32.mrb[0].mxu0
    %v2081 = vpop.f32.mrb[0].mxu0
    %v2082 = vadd.f32 %v1946, %v2081
    %v2083 = vpop.f32.mrb[0].mxu0
    %2084 = vmatprep.mubr.bf16.mxu0 %v1002
    %2085 = vmatmul.mubr.bf16.gmra.mrb[0].mxu0 %v1001
    %v2086 = vpop.f32.mrb[0].mxu0
    %v2087 = vadd.f32 %v1946, %v2086
    %v2088 = vpop.f32.mrb[0].mxu0
    %v2089 = vpop.f32.mrb[0].mxu0
    %v2090 = vadd.f32 %v1946, %v2089
    %v2091 = vpop.f32.mrb[0].mxu0
    %2092 = vmatprep.mubr.bf16.mxu0 %v1005
    %2093 = vmatmul.mubr.bf16.gmra.mrb[0].mxu0 %v1004
    %v2094 = vpop.f32.mrb[0].mxu0
    %v2095 = vadd.f32 %v1946, %v2094
    %v2096 = vpop.f32.mrb[0].mxu0
    %v2097 = vpop.f32.mrb[0].mxu0
    %v2098 = vadd.f32 %v1946, %v2097
    %v2099 = vpop.f32.mrb[0].mxu0
    %2100 = vmatprep.mubr.bf16.mxu0 %v1008
    %2101 = vmatmul.mubr.bf16.gmra.mrb[0].mxu0 %v1007
    %v2102 = vpop.f32.mrb[0].mxu0
    %v2103 = vadd.f32 %v1946, %v2102
    %v2104 = vpop.f32.mrb[0].mxu0
    %v2105 = vpop.f32.mrb[0].mxu0
    %v2106 = vadd.f32 %v1946, %v2105
    %v2107 = vpop.f32.mrb[0].mxu0
    %2108 = vmatprep.mubr.bf16.mxu0 %v1011
    %2109 = vmatmul.mubr.bf16.gmra.mrb[0].mxu0 %v1010
    %v2110 = vpop.f32.mrb[0].mxu0
    %v2111 = vadd.f32 %v1946, %v2110
    %v2112 = vpop.f32.mrb[0].mxu0
    %v2113 = vpop.f32.mrb[0].mxu0
    %v2114 = vadd.f32 %v1946, %v2113
    %v2115 = vpop.f32.mrb[0].mxu0
    %2116 = vmatprep.mubr.bf16.mxu0 %v1014
    %2117 = vmatmul.mubr.bf16.gmra.mrb[0].mxu0 %v1013
    %v2118 = vpop.f32.mrb[0].mxu0
    %v2119 = vadd.f32 %v1946, %v2118
    %v2120 = vpop.f32.mrb[0].mxu0
    %v2121 = vpop.f32.mrb[0].mxu0
    %v2122 = vadd.f32 %v1946, %v2121
    %v2123 = vpop.f32.mrb[0].mxu0
    %2124 = vmatprep.mubr.bf16.mxu0 %v1017
    %2125 = vmatmul.mubr.bf16.gmra.mrb[0].mxu0 %v1016
    %v2126 = vpop.f32.mrb[0].mxu0
    %v2127 = vadd.f32 %v1946, %v2126
    %v2128 = vpop.f32.mrb[0].mxu0
    %v2129 = vpop.f32.mrb[0].mxu0
    %v2130 = vadd.f32 %v1946, %v2129
    %v2131 = vpop.f32.mrb[0].mxu0
    %2132 = vmatprep.mubr.bf16.mxu0 %v1020
    %2133 = vmatmul.mubr.bf16.gmra.mrb[0].mxu0 %v1019
    %v2134 = vpop.f32.mrb[0].mxu0
    %v2135 = vadd.f32 %v1946, %v2134
    %v2136 = vpop.f32.mrb[0].mxu0
    %v2137 = vpop.f32.mrb[0].mxu0
    %v2138 = vadd.f32 %v1946, %v2137
    %v2139 = vpop.f32.mrb[0].mxu0
    %2140 = vmatprep.mubr.bf16.mxu0 %v1023
    %2141 = vmatmul.mubr.bf16.gmra.mrb[0].mxu0 %v1022
    %v2142 = vpop.f32.mrb[0].mxu0
    %v2143 = vadd.f32 %v1946, %v2142
    %v2144 = vpop.f32.mrb[0].mxu0
    %v2145 = vpop.f32.mrb[0].mxu0
    %v2146 = vadd.f32 %v1946, %v2145
    %v2147 = vpop.f32.mrb[0].mxu0
    %2148 = vmatprep.mubr.bf16.mxu0 %v1026
    %2149 = vmatmul.mubr.bf16.gmra.mrb[0].mxu0 %v1025
    %v2150 = vpop.f32.mrb[0].mxu0
    %v2151 = vadd.f32 %v1946, %v2150
    %v2152 = vpop.f32.mrb[0].mxu0
    %v2153 = vpop.f32.mrb[0].mxu0
    %v2154 = vadd.f32 %v1946, %v2153
    %v2155 = vpop.f32.mrb[0].mxu0
    %2156 = vmatprep.mubr.bf16.mxu0 %v1029
    %2157 = vmatmul.mubr.bf16.gmra.mrb[0].mxu0 %v1028
    %v2158 = vpop.f32.mrb[0].mxu0
    %v2159 = vadd.f32 %v1946, %v2158
    %v2160 = vpop.f32.mrb[0].mxu0
    %v2161 = vpop.f32.mrb[0].mxu0
    %v2162 = vadd.f32 %v1946, %v2161
    %v2163 = vpop.f32.mrb[0].mxu0
    %2164 = vmatprep.mubr.bf16.mxu0 %v1032
    %2165 = vmatmul.mubr.bf16.gmra.mrb[0].mxu0 %v1031
    %v2166 = vpop.f32.mrb[0].mxu0
    %v2167 = vadd.f32 %v1946, %v2166
    %v2168 = vpop.f32.mrb[0].mxu0
    %v2169 = vpop.f32.mrb[0].mxu0
    %v2170 = vadd.f32 %v1946, %v2169
    %v2171 = vpop.f32.mrb[0].mxu0
    %2172 = vdwg.mxu0
    %2173 = vmatprep.subr.bf16.mxu0 0
    %2174 = vmatpush1.bf16.msra.mxu0 %v1933
    %2175 = vmatprep.subr.bf16.mxu0 0
    %2176 = vmatpush1.bf16.msra.mxu0 %v1934
    %2177 = vmatprep.subr.bf16.mxu0 0
    %2178 = vmatpush1.bf16.msra.mxu0 %v1935
    %2179 = vmatprep.subr.bf16.mxu0 0
    %2180 = vmatpush1.bf16.msra.mxu0 %v1936
    %2181 = vmatprep.subr.bf16.mxu0 0
    %2182 = vmatpush1.bf16.msra.mxu0 %v1937
    %2183 = vmatprep.subr.bf16.mxu0 0
    %2184 = vmatpush1.bf16.msra.mxu0 %v1938
    %2185 = vmatprep.subr.bf16.mxu0 0
    %2186 = vmatpush1.bf16.msra.mxu0 %v1939
    %2187 = vmatprep.subr.bf16.mxu0 0
    %2188 = vmatpush1.bf16.msra.mxu0 %v1940
    %2189 = vmatprep.subr.bf16.mxu0 0
    %2190 = vmatpush1.bf16.msra.mxu0 0
    %2191 = vmatprep.subr.bf16.mxu0 0
    %2192 = vmatpush1.bf16.msra.mxu0 0
    %2193 = vmatprep.subr.bf16.mxu0 0
    %2194 = vmatpush1.bf16.msra.mxu0 0
    %2195 = vmatprep.subr.bf16.mxu0 0
    %2196 = vmatpush1.bf16.msra.mxu0 0
    %2197 = vmatprep.subr.bf16.mxu0 0
    %2198 = vmatpush1.bf16.msra.mxu0 0
    %2199 = vmatprep.subr.bf16.mxu0 0
    %2200 = vmatpush1.bf16.msra.mxu0 0
    %2201 = vmatprep.subr.bf16.mxu0 0
    %2202 = vmatpush1.bf16.msra.mxu0 0
    %2203 = vmatprep.subr.bf16.mxu0 0
    %2204 = vmatpush1.bf16.msra.mxu0 0
    %2205 = vmatprep.mubr.bf16.mxu0 0
    %2206 = vmatmul.mubr.bf16.gmra.mrb[0].mxu0 %v964
    %v2207 = vpop.f32.mrb[0].mxu0
    %v2208 = vadd.f32 %v1983, %v2207
    %v2209 = vpop.f32.mrb[0].mxu0
    %v2210 = vpop.f32.mrb[0].mxu0
    %v2211 = vadd.f32 %v1986, %v2210
    %v2212 = vpop.f32.mrb[0].mxu0
    %2213 = vmatprep.mubr.bf16.mxu0 0
    %2214 = vmatmul.mubr.bf16.gmra.mrb[0].mxu0 %v967
    %v2215 = vpop.f32.mrb[0].mxu0
    %v2216 = vadd.f32 %v1991, %v2215
    %v2217 = vpop.f32.mrb[0].mxu0
    %v2218 = vpop.f32.mrb[0].mxu0
    %v2219 = vadd.f32 %v1994, %v2218
    %v2220 = vpop.f32.mrb[0].mxu0
    %2221 = vmatprep.mubr.bf16.mxu0 0
    %2222 = vmatmul.mubr.bf16.gmra.mrb[0].mxu0 %v970
    %v2223 = vpop.f32.mrb[0].mxu0
    %v2224 = vadd.f32 %v1999, %v2223
    %v2225 = vpop.f32.mrb[0].mxu0
    %v2226 = vpop.f32.mrb[0].mxu0
    %v2227 = vadd.f32 %v2002, %v2226
    %v2228 = vpop.f32.mrb[0].mxu0
    %2229 = vmatprep.mubr.bf16.mxu0 0
    %2230 = vmatmul.mubr.bf16.gmra.mrb[0].mxu0 %v973
    %v2231 = vpop.f32.mrb[0].mxu0
    %v2232 = vadd.f32 %v2007, %v2231
    %v2233 = vpop.f32.mrb[0].mxu0
    %v2234 = vpop.f32.mrb[0].mxu0
    %v2235 = vadd.f32 %v2010, %v2234
    %v2236 = vpop.f32.mrb[0].mxu0
    %2237 = vmatprep.mubr.bf16.mxu0 0
    %2238 = vmatmul.mubr.bf16.gmra.mrb[0].mxu0 %v976
    %v2239 = vpop.f32.mrb[0].mxu0
    %v2240 = vadd.f32 %v2015, %v2239
    %v2241 = vpop.f32.mrb[0].mxu0
    %v2242 = vpop.f32.mrb[0].mxu0
    %v2243 = vadd.f32 %v2018, %v2242
    %v2244 = vpop.f32.mrb[0].mxu0
    %2245 = vmatprep.mubr.bf16.mxu0 0
    %2246 = vmatmul.mubr.bf16.gmra.mrb[0].mxu0 %v979
    %v2247 = vpop.f32.mrb[0].mxu0
    %v2248 = vadd.f32 %v2023, %v2247
    %v2249 = vpop.f32.mrb[0].mxu0
    %v2250 = vpop.f32.mrb[0].mxu0
    %v2251 = vadd.f32 %v2026, %v2250
    %v2252 = vpop.f32.mrb[0].mxu0
    %2253 = vmatprep.mubr.bf16.mxu0 0
    %2254 = vmatmul.mubr.bf16.gmra.mrb[0].mxu0 %v982
    %v2255 = vpop.f32.mrb[0].mxu0
    %v2256 = vadd.f32 %v2031, %v2255
    %v2257 = vpop.f32.mrb[0].mxu0
    %v2258 = vpop.f32.mrb[0].mxu0
    %v2259 = vadd.f32 %v2034, %v2258
    %v2260 = vpop.f32.mrb[0].mxu0
    %2261 = vmatprep.mubr.bf16.mxu0 0
    %2262 = vmatmul.mubr.bf16.gmra.mrb[0].mxu0 %v985
    %v2263 = vpop.f32.mrb[0].mxu0
    %v2264 = vadd.f32 %v2039, %v2263
    %v2265 = vpop.f32.mrb[0].mxu0
    %v2266 = vpop.f32.mrb[0].mxu0
    %v2267 = vadd.f32 %v2042, %v2266
    %v2268 = vpop.f32.mrb[0].mxu0
    %2269 = vmatprep.mubr.bf16.mxu0 0
    %2270 = vmatmul.mubr.bf16.gmra.mrb[0].mxu0 %v988
    %v2271 = vpop.f32.mrb[0].mxu0
    %v2272 = vadd.f32 %v2047, %v2271
    %v2273 = vpop.f32.mrb[0].mxu0
    %v2274 = vpop.f32.mrb[0].mxu0
    %v2275 = vadd.f32 %v2050, %v2274
    %v2276 = vpop.f32.mrb[0].mxu0
    %2277 = vmatprep.mubr.bf16.mxu0 0
    %2278 = vmatmul.mubr.bf16.gmra.mrb[0].mxu0 %v991
    %v2279 = vpop.f32.mrb[0].mxu0
    %v2280 = vadd.f32 %v2055, %v2279
    %v2281 = vpop.f32.mrb[0].mxu0
    %v2282 = vpop.f32.mrb[0].mxu0
    %v2283 = vadd.f32 %v2058, %v2282
    %v2284 = vpop.f32.mrb[0].mxu0
    %2285 = vmatprep.mubr.bf16.mxu0 0
    %2286 = vmatmul.mubr.bf16.gmra.mrb[0].mxu0 %v994
    %v2287 = vpop.f32.mrb[0].mxu0
    %v2288 = vadd.f32 %v2063, %v2287
    %v2289 = vpop.f32.mrb[0].mxu0
    %v2290 = vpop.f32.mrb[0].mxu0
    %v2291 = vadd.f32 %v2066, %v2290
    %v2292 = vpop.f32.mrb[0].mxu0
    %2293 = vmatprep.mubr.bf16.mxu0 0
    %2294 = vmatmul.mubr.bf16.gmra.mrb[0].mxu0 %v997
    %v2295 = vpop.f32.mrb[0].mxu0
    %v2296 = vadd.f32 %v2071, %v2295
    %v2297 = vpop.f32.mrb[0].mxu0
    %v2298 = vpop.f32.mrb[0].mxu0
    %v2299 = vadd.f32 %v2074, %v2298
    %v2300 = vpop.f32.mrb[0].mxu0
    %2301 = vmatprep.mubr.bf16.mxu0 0
    %2302 = vmatmul.mubr.bf16.gmra.mrb[0].mxu0 %v1000
    %v2303 = vpop.f32.mrb[0].mxu0
    %v2304 = vadd.f32 %v2079, %v2303
    %v2305 = vpop.f32.mrb[0].mxu0
    %v2306 = vpop.f32.mrb[0].mxu0
    %v2307 = vadd.f32 %v2082, %v2306
    %v2308 = vpop.f32.mrb[0].mxu0
    %2309 = vmatprep.mubr.bf16.mxu0 0
    %2310 = vmatmul.mubr.bf16.gmra.mrb[0].mxu0 %v1003
    %v2311 = vpop.f32.mrb[0].mxu0
    %v2312 = vadd.f32 %v2087, %v2311
    %v2313 = vpop.f32.mrb[0].mxu0
    %v2314 = vpop.f32.mrb[0].mxu0
    %v2315 = vadd.f32 %v2090, %v2314
    %v2316 = vpop.f32.mrb[0].mxu0
    %2317 = vmatprep.mubr.bf16.mxu0 0
    %2318 = vmatmul.mubr.bf16.gmra.mrb[0].mxu0 %v1006
    %v2319 = vpop.f32.mrb[0].mxu0
    %v2320 = vadd.f32 %v2095, %v2319
    %v2321 = vpop.f32.mrb[0].mxu0
    %v2322 = vpop.f32.mrb[0].mxu0
    %v2323 = vadd.f32 %v2098, %v2322
    %v2324 = vpop.f32.mrb[0].mxu0
    %2325 = vmatprep.mubr.bf16.mxu0 0
    %2326 = vmatmul.mubr.bf16.gmra.mrb[0].mxu0 %v1009
    %v2327 = vpop.f32.mrb[0].mxu0
    %v2328 = vadd.f32 %v2103, %v2327
    %v2329 = vpop.f32.mrb[0].mxu0
    %v2330 = vpop.f32.mrb[0].mxu0
    %v2331 = vadd.f32 %v2106, %v2330
    %v2332 = vpop.f32.mrb[0].mxu0
    %2333 = vmatprep.mubr.bf16.mxu0 0
    %2334 = vmatmul.mubr.bf16.gmra.mrb[0].mxu0 %v1012
    %v2335 = vpop.f32.mrb[0].mxu0
    %v2336 = vadd.f32 %v2111, %v2335
    %v2337 = vpop.f32.mrb[0].mxu0
    %v2338 = vpop.f32.mrb[0].mxu0
    %v2339 = vadd.f32 %v2114, %v2338
    %v2340 = vpop.f32.mrb[0].mxu0
    %2341 = vmatprep.mubr.bf16.mxu0 0
    %2342 = vmatmul.mubr.bf16.gmra.mrb[0].mxu0 %v1015
    %v2343 = vpop.f32.mrb[0].mxu0
    %v2344 = vadd.f32 %v2119, %v2343
    %v2345 = vpop.f32.mrb[0].mxu0
    %v2346 = vpop.f32.mrb[0].mxu0
    %v2347 = vadd.f32 %v2122, %v2346
    %v2348 = vpop.f32.mrb[0].mxu0
    %2349 = vmatprep.mubr.bf16.mxu0 0
    %2350 = vmatmul.mubr.bf16.gmra.mrb[0].mxu0 %v1018
    %v2351 = vpop.f32.mrb[0].mxu0
    %v2352 = vadd.f32 %v2127, %v2351
    %v2353 = vpop.f32.mrb[0].mxu0
    %v2354 = vpop.f32.mrb[0].mxu0
    %v2355 = vadd.f32 %v2130, %v2354
    %v2356 = vpop.f32.mrb[0].mxu0
    %2357 = vmatprep.mubr.bf16.mxu0 0
    %2358 = vmatmul.mubr.bf16.gmra.mrb[0].mxu0 %v1021
    %v2359 = vpop.f32.mrb[0].mxu0
    %v2360 = vadd.f32 %v2135, %v2359
    %v2361 = vpop.f32.mrb[0].mxu0
    %v2362 = vpop.f32.mrb[0].mxu0
    %v2363 = vadd.f32 %v2138, %v2362
    %v2364 = vpop.f32.mrb[0].mxu0
    %2365 = vmatprep.mubr.bf16.mxu0 0
    %2366 = vmatmul.mubr.bf16.gmra.mrb[0].mxu0 %v1024
    %v2367 = vpop.f32.mrb[0].mxu0
    %v2368 = vadd.f32 %v2143, %v2367
    %v2369 = vpop.f32.mrb[0].mxu0
    %v2370 = vpop.f32.mrb[0].mxu0
    %v2371 = vadd.f32 %v2146, %v2370
    %v2372 = vpop.f32.mrb[0].mxu0
    %2373 = vmatprep.mubr.bf16.mxu0 0
    %2374 = vmatmul.mubr.bf16.gmra.mrb[0].mxu0 %v1027
    %v2375 = vpop.f32.mrb[0].mxu0
    %v2376 = vadd.f32 %v2151, %v2375
    %v2377 = vpop.f32.mrb[0].mxu0
    %v2378 = vpop.f32.mrb[0].mxu0
    %v2379 = vadd.f32 %v2154, %v2378
    %v2380 = vpop.f32.mrb[0].mxu0
    %2381 = vmatprep.mubr.bf16.mxu0 0
    %2382 = vmatmul.mubr.bf16.gmra.mrb[0].mxu0 %v1030
    %v2383 = vpop.f32.mrb[0].mxu0
    %v2384 = vadd.f32 %v2159, %v2383
    %v2385 = vpop.f32.mrb[0].mxu0
    %v2386 = vpop.f32.mrb[0].mxu0
    %v2387 = vadd.f32 %v2162, %v2386
    %v2388 = vpop.f32.mrb[0].mxu0
    %2389 = vmatprep.mubr.bf16.mxu0 0
    %2390 = vmatmul.mubr.bf16.gmra.mrb[0].mxu0 %v1033
    %v2391 = vpop.f32.mrb[0].mxu0
    %v2392 = vadd.f32 %v2167, %v2391
    %v2393 = vpop.f32.mrb[0].mxu0
    %v2394 = vpop.f32.mrb[0].mxu0
    %v2395 = vadd.f32 %v2170, %v2394
    %v2396 = vpop.f32.mrb[0].mxu0
    %2397 = vdwg.mxu0
    %v2398 = vmax.f32 %v2208, 0.0
    %v2399 = vmax.f32 %v2211, 0.0
    %v2400 = vmax.f32 %v2216, 0.0
    %v2401 = vmax.f32 %v2219, 0.0
    %v2402 = vmax.f32 %v2224, 0.0
    %v2403 = vmax.f32 %v2227, 0.0
    %v2404 = vmax.f32 %v2232, 0.0
    %v2405 = vmax.f32 %v2235, 0.0
    %v2406 = vmax.f32 %v2240, 0.0
    %v2407 = vmax.f32 %v2243, 0.0
    %v2408 = vmax.f32 %v2248, 0.0
    %v2409 = vmax.f32 %v2251, 0.0
    %v2410 = vmax.f32 %v2256, 0.0
    %v2411 = vmax.f32 %v2259, 0.0
    %v2412 = vmax.f32 %v2264, 0.0
    %v2413 = vmax.f32 %v2267, 0.0
    %v2414 = vmax.f32 %v2272, 0.0
    %v2415 = vmax.f32 %v2275, 0.0
    %v2416 = vmax.f32 %v2280, 0.0
    %v2417 = vmax.f32 %v2283, 0.0
    %v2418 = vmax.f32 %v2288, 0.0
    %v2419 = vmax.f32 %v2291, 0.0
    %v2420 = vmax.f32 %v2296, 0.0
    %v2421 = vmax.f32 %v2299, 0.0
    %v2422 = vmax.f32 %v2304, 0.0
    %v2423 = vmax.f32 %v2307, 0.0
    %v2424 = vmax.f32 %v2312, 0.0
    %v2425 = vmax.f32 %v2315, 0.0
    %v2426 = vmax.f32 %v2320, 0.0
    %v2427 = vmax.f32 %v2323, 0.0
    %v2428 = vmax.f32 %v2328, 0.0
    %v2429 = vmax.f32 %v2331, 0.0
    %v2430 = vmax.f32 %v2336, 0.0
    %v2431 = vmax.f32 %v2339, 0.0
    %v2432 = vmax.f32 %v2344, 0.0
    %v2433 = vmax.f32 %v2347, 0.0
    %v2434 = vmax.f32 %v2352, 0.0
    %v2435 = vmax.f32 %v2355, 0.0
    %v2436 = vmax.f32 %v2360, 0.0
    %v2437 = vmax.f32 %v2363, 0.0
    %v2438 = vmax.f32 %v2368, 0.0
    %v2439 = vmax.f32 %v2371, 0.0
    %v2440 = vmax.f32 %v2376, 0.0
    %v2441 = vmax.f32 %v2379, 0.0
    %v2442 = vmax.f32 %v2384, 0.0
    %v2443 = vmax.f32 %v2387, 0.0
    %v2444 = vmax.f32 %v2392, 0.0
    %v2445 = vmax.f32 %v2395, 0.0
    %v2446 = vpack.c.bf16 %v2399, %v2398
    %v2447 = vpack.c.bf16 %v2401, %v2400
    %v2448 = vpack.c.bf16 %v2403, %v2402
    %v2449 = vpack.c.bf16 %v2405, %v2404
    %v2450 = vpack.c.bf16 %v2407, %v2406
    %v2451 = vpack.c.bf16 %v2409, %v2408
    %v2452 = vpack.c.bf16 %v2411, %v2410
    %v2453 = vpack.c.bf16 %v2413, %v2412
    %v2454 = vpack.c.bf16 %v2415, %v2414
    %v2455 = vpack.c.bf16 %v2417, %v2416
    %v2456 = vpack.c.bf16 %v2419, %v2418
    %v2457 = vpack.c.bf16 %v2421, %v2420
    %v2458 = vpack.c.bf16 %v2423, %v2422
    %v2459 = vpack.c.bf16 %v2425, %v2424
    %v2460 = vpack.c.bf16 %v2427, %v2426
    %v2461 = vpack.c.bf16 %v2429, %v2428
    %v2462 = vpack.c.bf16 %v2431, %v2430
    %v2463 = vpack.c.bf16 %v2433, %v2432
    %v2464 = vpack.c.bf16 %v2435, %v2434
    %v2465 = vpack.c.bf16 %v2437, %v2436
    %v2466 = vpack.c.bf16 %v2439, %v2438
    %v2467 = vpack.c.bf16 %v2441, %v2440
    %v2468 = vpack.c.bf16 %v2443, %v2442
    %v2469 = vpack.c.bf16 %v2445, %v2444
    %v2470 = vld [vmem:[#allocation7] sm:$0xff]
    %v2471 = vld [vmem:[#allocation7 + $0x8] sm:$0xf]
    %v2474 = vunpack.c.l.b16 %v2470
    %v2475 = vunpack.c.h.b16 %v2470
    %v2476 = vunpack.c.l.b16 %v2471
    %v2477 = vpack.c.b16 %v2474, %v2474
    %v2478 = vpack.c.b16 %v2475, %v2475
    %v2479 = vpack.c.b16 %v2476, %v2476
    %2483 = vmatprep.subr.bf16.mxu0 0
    %2484 = vmatpush1.bf16.msra.mxu0 %v2446
    %2485 = vmatprep.subr.bf16.mxu0 0
    %2486 = vmatpush1.bf16.msra.mxu0 %v2447
    %2487 = vmatprep.subr.bf16.mxu0 0
    %2488 = vmatpush1.bf16.msra.mxu0 %v2448
    %2489 = vmatprep.subr.bf16.mxu0 0
    %2490 = vmatpush1.bf16.msra.mxu0 %v2449
    %2491 = vmatprep.subr.bf16.mxu0 0
    %2492 = vmatpush1.bf16.msra.mxu0 %v2450
    %2493 = vmatprep.subr.bf16.mxu0 0
    %2494 = vmatpush1.bf16.msra.mxu0 %v2451
    %2495 = vmatprep.subr.bf16.mxu0 0
    %2496 = vmatpush1.bf16.msra.mxu0 %v2452
    %2497 = vmatprep.subr.bf16.mxu0 0
    %2498 = vmatpush1.bf16.msra.mxu0 %v2453
    %2499 = vmatprep.subr.bf16.mxu0 0
    %2500 = vmatpush1.bf16.msra.mxu0 %v2454
    %2501 = vmatprep.subr.bf16.mxu0 0
    %2502 = vmatpush1.bf16.msra.mxu0 %v2455
    %2503 = vmatprep.subr.bf16.mxu0 0
    %2504 = vmatpush1.bf16.msra.mxu0 %v2456
    %2505 = vmatprep.subr.bf16.mxu0 0
    %2506 = vmatpush1.bf16.msra.mxu0 %v2457
    %2507 = vmatprep.subr.bf16.mxu0 0
    %2508 = vmatpush1.bf16.msra.mxu0 %v2458
    %2509 = vmatprep.subr.bf16.mxu0 0
    %2510 = vmatpush1.bf16.msra.mxu0 %v2459
    %2511 = vmatprep.subr.bf16.mxu0 0
    %2512 = vmatpush1.bf16.msra.mxu0 %v2460
    %2513 = vmatprep.subr.bf16.mxu0 0
    %2514 = vmatpush1.bf16.msra.mxu0 %v2461
    %2515 = vmatprep.mubr.bf16.mxu0 %v2478
    %2516 = vmatmul.mubr.bf16.gmra.mrb[0].mxu0 %v2477
    %v2517 = vpop.f32.mrb[0].mxu0
    %v2518 = vadd.f32 0.0, %v2517
    %v2519 = vpop.f32.mrb[0].mxu0
    %v2520 = vpop.f32.mrb[0].mxu0
    %v2521 = vpop.f32.mrb[0].mxu0
    %2522 = vdwg.mxu0
    %2523 = vmatprep.subr.bf16.mxu0 0
    %2524 = vmatpush1.bf16.msra.mxu0 %v2462
    %2525 = vmatprep.subr.bf16.mxu0 0
    %2526 = vmatpush1.bf16.msra.mxu0 %v2463
    %2527 = vmatprep.subr.bf16.mxu0 0
    %2528 = vmatpush1.bf16.msra.mxu0 %v2464
    %2529 = vmatprep.subr.bf16.mxu0 0
    %2530 = vmatpush1.bf16.msra.mxu0 %v2465
    %2531 = vmatprep.subr.bf16.mxu0 0
    %2532 = vmatpush1.bf16.msra.mxu0 %v2466
    %2533 = vmatprep.subr.bf16.mxu0 0
    %2534 = vmatpush1.bf16.msra.mxu0 %v2467
    %2535 = vmatprep.subr.bf16.mxu0 0
    %2536 = vmatpush1.bf16.msra.mxu0 %v2468
    %2537 = vmatprep.subr.bf16.mxu0 0
    %2538 = vmatpush1.bf16.msra.mxu0 %v2469
    %2539 = vmatprep.subr.bf16.mxu0 0
    %2540 = vmatpush1.bf16.msra.mxu0 0
    %2541 = vmatprep.subr.bf16.mxu0 0
    %2542 = vmatpush1.bf16.msra.mxu0 0
    %2543 = vmatprep.subr.bf16.mxu0 0
    %2544 = vmatpush1.bf16.msra.mxu0 0
    %2545 = vmatprep.subr.bf16.mxu0 0
    %2546 = vmatpush1.bf16.msra.mxu0 0
    %2547 = vmatprep.subr.bf16.mxu0 0
    %2548 = vmatpush1.bf16.msra.mxu0 0
    %2549 = vmatprep.subr.bf16.mxu0 0
    %2550 = vmatpush1.bf16.msra.mxu0 0
    %2551 = vmatprep.subr.bf16.mxu0 0
    %2552 = vmatpush1.bf16.msra.mxu0 0
    %2553 = vmatprep.subr.bf16.mxu0 0
    %2554 = vmatpush1.bf16.msra.mxu0 0
    %2555 = vmatprep.mubr.bf16.mxu0 0
    %2556 = vmatmul.mubr.bf16.gmra.mrb[0].mxu0 %v2479
    %v2557 = vpop.f32.mrb[0].mxu0
    %v2558 = vadd.f32 %v2518, %v2557
    %v2559 = vpop.f32.mrb[0].mxu0
    %v2560 = vpop.f32.mrb[0].mxu0
    %v2561 = vpop.f32.mrb[0].mxu0
    %2562 = vdwg.mxu0
    %v2563 = vpack.c.bf16 %v2558, %v2558
    %v2564 = vld [vmem:[#allocation11] sm:$0xf]
    %v2565 = vld [vmem:[#allocation11 + $0x4] sm:$0xf]
    %v2566 = vld [vmem:[#allocation11 + $0x8] sm:$0xf]
    %v2567 = vld [vmem:[#allocation11 + $0xc] sm:$0xf]
    %v2568 = vld [vmem:[#allocation11 + $0x10] sm:$0xf]
    %v2569 = vld [vmem:[#allocation11 + $0x14] sm:$0xf]
    %v2570 = vld [vmem:[#allocation11 + $0x18] sm:$0xf]
    %v2571 = vld [vmem:[#allocation11 + $0x1c] sm:$0xf]
    %v2572 = vld [vmem:[#allocation11 + $0x20] sm:$0xf]
    %v2573 = vld [vmem:[#allocation11 + $0x24] sm:$0xf]
    %v2574 = vld [vmem:[#allocation11 + $0x28] sm:$0xf]
    %v2575 = vld [vmem:[#allocation11 + $0x2c] sm:$0xf]
    %v2576 = vld [vmem:[#allocation11 + $0x30] sm:$0xf]
    %v2577 = vld [vmem:[#allocation11 + $0x34] sm:$0xf]
    %v2578 = vld [vmem:[#allocation11 + $0x38] sm:$0xf]
    %v2579 = vld [vmem:[#allocation11 + $0x3c] sm:$0xf]
    %v2580 = vld [vmem:[%s8] sm:$0x1]
    %v2582 = vlaneseq
    %v2583 = vshrl.u32 %v2582, 7
    %v2584 = vsub.s32 0, %v2583
    %v2585 = vrot.slane %v2580, %v2584
    %v2603 = vunpack.c.l.b16 %v2564
    %v2604 = vunpack.c.l.b16 %v2565
    %v2605 = vunpack.c.l.b16 %v2566
    %v2606 = vunpack.c.l.b16 %v2567
    %v2607 = vunpack.c.l.b16 %v2568
    %v2608 = vunpack.c.l.b16 %v2569
    %v2609 = vunpack.c.l.b16 %v2570
    %v2610 = vunpack.c.l.b16 %v2571
    %v2611 = vunpack.c.l.b16 %v2572
    %v2612 = vunpack.c.l.b16 %v2573
    %v2613 = vunpack.c.l.b16 %v2574
    %v2614 = vunpack.c.l.b16 %v2575
    %v2615 = vunpack.c.l.b16 %v2576
    %v2616 = vunpack.c.l.b16 %v2577
    %v2617 = vunpack.c.l.b16 %v2578
    %v2618 = vunpack.c.l.b16 %v2579
    %v2619 = vpack.c.b16 %v2604, %v2603
    %v2620 = vpack.c.b16 %v2606, %v2605
    %v2621 = vpack.c.b16 %v2608, %v2607
    %v2622 = vpack.c.b16 %v2610, %v2609
    %v2623 = vpack.c.b16 %v2612, %v2611
    %v2624 = vpack.c.b16 %v2614, %v2613
    %v2625 = vpack.c.b16 %v2616, %v2615
    %v2626 = vpack.c.b16 %v2618, %v2617
    %2635 = vmatprep.subr.bf16.mxu0 0
    %2636 = vmatpush1.bf16.msra.mxu0 %v2619
    %2637 = vmatprep.subr.bf16.mxu0 0
    %2638 = vmatpush1.bf16.msra.mxu0 %v2620
    %2639 = vmatprep.subr.bf16.mxu0 0
    %2640 = vmatpush1.bf16.msra.mxu0 %v2621
    %2641 = vmatprep.subr.bf16.mxu0 0
    %2642 = vmatpush1.bf16.msra.mxu0 %v2622
    %2643 = vmatprep.subr.bf16.mxu0 0
    %2644 = vmatpush1.bf16.msra.mxu0 %v2623
    %2645 = vmatprep.subr.bf16.mxu0 0
    %2646 = vmatpush1.bf16.msra.mxu0 %v2624
    %2647 = vmatprep.subr.bf16.mxu0 0
    %2648 = vmatpush1.bf16.msra.mxu0 %v2625
    %2649 = vmatprep.subr.bf16.mxu0 0
    %2650 = vmatpush1.bf16.msra.mxu0 %v2626
    %2651 = vmatprep.subr.bf16.mxu0 0
    %2652 = vmatpush1.bf16.msra.mxu0 0
    %2653 = vmatprep.subr.bf16.mxu0 0
    %2654 = vmatpush1.bf16.msra.mxu0 0
    %2655 = vmatprep.subr.bf16.mxu0 0
    %2656 = vmatpush1.bf16.msra.mxu0 0
    %2657 = vmatprep.subr.bf16.mxu0 0
    %2658 = vmatpush1.bf16.msra.mxu0 0
    %2659 = vmatprep.subr.bf16.mxu0 0
    %2660 = vmatpush1.bf16.msra.mxu0 0
    %2661 = vmatprep.subr.bf16.mxu0 0
    %2662 = vmatpush1.bf16.msra.mxu0 0
    %2663 = vmatprep.subr.bf16.mxu0 0
    %2664 = vmatpush1.bf16.msra.mxu0 0
    %2665 = vmatprep.subr.bf16.mxu0 0
    %2666 = vmatpush1.bf16.msra.mxu0 0
    %2667 = vmatprep.mubr.bf16.mxu0 0
    %2668 = vmatmul.mubr.bf16.gmra.mrb[0].mxu0 %v2563
    %v2669 = vpop.f32.mrb[0].mxu0
    %v2670 = vadd.f32 %v2585, %v2669
    %v2671 = vpop.f32.mrb[0].mxu0
    %v2672 = vpop.f32.mrb[0].mxu0
    %v2673 = vpop.f32.mrb[0].mxu0
    %2674 = vdwg.mxu0
    %2675 = vst [vmem:[#allocation13] sm:$0xff] %v2670
    // Predicated region
    $region62: #{tpu_custom_call.1} parent=1 // pred_check
      _
    $region63: #{tpu_custom_call.1} parent=1 // pred_check_branch
      %2677 = sbr.rel (0) target = $region65
    $region64: #{tpu_custom_call.1} parent=1 // pred_region
      %s2679 = ssub.s32 128, 128
      %2680 = vsyncadd [#allocation4], %s2679
      %s2682 = sshll.u32 [#allocation13], 4
      %s2683 = int_to_ptr.vmem [resolvable:$true] %s2682
      %2685 = dma.vmem_to_hbm [thread:$0]  %s2683, 128, %s9, [#allocation4]
    $region65: #{tpu_custom_call.1} parent=1 // pred_fallthru
      _
    // Predicated region
    $region66: #{tpu_custom_call.1} parent=1 // pred_check
      _
    $region67: #{tpu_custom_call.1} parent=1 // pred_check_branch
      %2687 = sbr.rel (0) target = $region69
    $region68: #{tpu_custom_call.1} parent=1 // pred_region
      %2688 = dma.done [#allocation4], 128
    $region69: #{tpu_custom_call.1} parent=1 // pred_fallthru
      _
    %2689 = vsyncpa [#allocation3], 1
    %2690 = vsyncpa [#allocation6], 1
    %2691 = vsyncpa [#allocation9], 1
    %2692 = vsyncpa [#allocation12], 1
    %2693 = vsyncpa [#allocation4], 1

</llo_original>
